<compile_context>
chip_gen: v7x
topology: tpu7x:2x2x1
jax: 0.10.0
libtpu: 0.0.40
codegen_flags: <defaults>
</compile_context>

<pallas_src>
import functools

import jax
import jax.numpy as jnp
from jax.experimental import pallas as pl
from jax.experimental.pallas import tpu as pltpu


# --------------------------------------------------------------------------
# Shared conv + BN-partial-stats core (runs on one (C_in, tile_L+halo) window)
# --------------------------------------------------------------------------
def _conv_core(win, w_ref, y_ref, stats_ref, *, taps, dil, tile_l, l_out,
               t_per_split):
    # win:       (C_in, tile_L + halo)   already in compute dtype
    # w_ref:     (C_out, K*C_in)         tap-major flattened weights
    # y_ref:     (1, C_out, tile_L)      conv output tile (lane-dense)
    # stats_ref: (1, 1, C_out, 2)        per-(batch, split) (sum, sum_sq) acc
    s = pl.program_id(1)
    t = pl.program_id(2)
    g = s * t_per_split + t                       # global tile index
    c_out = y_ref.shape[1]

    # Stack the K shifted slices along sublanes -> one big MXU contraction.
    stacked = jnp.concatenate(
        [win[:, k * dil:k * dil + tile_l] for k in range(taps)], axis=0)
    acc = jnp.dot(w_ref[...], stacked, preferred_element_type=jnp.float32)
    y_ref[0] = acc.astype(y_ref.dtype)

    @pl.when(t == 0)
    def _():
        stats_ref[...] = jnp.zeros_like(stats_ref)

    def _accum(vals):
        part = jnp.concatenate(
            [jnp.sum(vals, axis=1, keepdims=True),
             jnp.sum(vals * vals, axis=1, keepdims=True)], axis=1)
        stats_ref[0, 0] = stats_ref[0, 0] + part

    interior = (g + 1) * tile_l <= l_out          # tile fully inside l_out?

    @pl.when(interior)
    def _():
        _accum(acc)                               # unmasked fast path

    @pl.when(jnp.logical_not(interior))
    def _():
        col = jax.lax.broadcasted_iota(jnp.int32, (c_out, tile_l), 1)
        _accum(jnp.where(g * tile_l + col < l_out, acc, 0.0))


def _conv_stats_kernel(xm_ref, xh_ref, w_ref, y_ref, stats_ref, *,
                       taps, dil, tile_l, l_out, t_per_split, compute_dtype):
    win = jnp.concatenate([xm_ref[0], xh_ref[0, 0]], axis=-1)
    _conv_core(win.astype(compute_dtype), w_ref, y_ref, stats_ref,
               taps=taps, dil=dil, tile_l=tile_l, l_out=l_out,
               t_per_split=t_per_split)


def _fused_conv_stats_kernel(xm_ref, xh_ref, scale_ref, shift_ref, w_ref,
                             y_ref, stats_ref, *, taps, dil, tile_l, l_out,
                             t_per_split, neg_slope, compute_dtype):
    # Previous layer's folded BN + LeakyReLU fused onto the conv input window.
    raw = jnp.concatenate([xm_ref[0], xh_ref[0, 0]], axis=-1).astype(jnp.float32)
    z = raw * scale_ref[...] + shift_ref[...]
    z = jnp.where(z >= 0, z, neg_slope * z)
    _conv_core(z.astype(compute_dtype), w_ref, y_ref, stats_ref,
               taps=taps, dil=dil, tile_l=tile_l, l_out=l_out,
               t_per_split=t_per_split)


def _bn_act_kernel(y_ref, scale_ref, shift_ref, o_ref, *, neg_slope):
    z = y_ref[0].astype(jnp.float32) * scale_ref[...] + shift_ref[...]
    o_ref[0] = jnp.where(z >= 0, z, neg_slope * z).astype(o_ref.dtype)


# --------------------------------------------------------------------------
# One conv pass (optionally with the previous layer's BN+act fused in)
# --------------------------------------------------------------------------
def _conv_pass(x_arr, l_in, w, pre_scale, pre_shift, *, tile_l, kernel_size,
               dilation, neg_slope, compute_dtype, storage_dtype):
    n, c_in, l_arr = x_arr.shape
    assert l_arr >= l_in
    c_out, c_in_w, k = w.shape
    assert c_in_w == c_in and k == kernel_size
    halo = (k - 1) * dilation
    l_out = l_in - halo
    assert l_out >= 1

    t_tiles = pl.cdiv(l_out, tile_l)
    n_split = 2 if (t_tiles >= 2 and t_tiles % 2 == 0) else 1  # megacore L-split
    tps = t_tiles // n_split
    l_main = t_tiles * tile_l

    # Main-block source: needs >= l_main columns and must satisfy the (8,128)
    # block rule (tile_l % 128 == 0, or block == full array extent).  Between
    # layers this is a no-op (carried padded activations are reused directly).
    if tile_l % 128 == 0:
        x_main = x_arr if l_arr >= l_main else jnp.pad(
            x_arr, ((0, 0), (0, 0), (0, l_main - l_arr)))
    else:
        assert t_tiles == 1
        x_main = x_arr if l_arr == l_main else x_arr[:, :, :l_main]

    # Tiny halo side-array: columns [(t+1)*tile_l, (t+1)*tile_l + halo).
    # Clamped indices only feed conv outputs >= l_out (masked / sliced off).
    col_idx = (jnp.arange(1, t_tiles + 1)[:, None] * tile_l
               + jnp.arange(halo)[None, :])
    col_idx = jnp.minimum(col_idx, l_arr - 1)
    x_halo = jnp.transpose(x_arr[:, :, col_idx], (0, 2, 1, 3))  # (N,T,C_in,halo)

    # Tap-major flattened weights for a single stacked MXU dot.
    w_flat = jnp.transpose(w, (0, 2, 1)).reshape(c_out, k * c_in)
    w_flat = w_flat.astype(compute_dtype)

    fused = pre_scale is not None
    if fused:
        kern = functools.partial(
            _fused_conv_stats_kernel, taps=k, dil=dilation, tile_l=tile_l,
            l_out=l_out, t_per_split=tps, neg_slope=neg_slope,
            compute_dtype=compute_dtype)
    else:
        kern = functools.partial(
            _conv_stats_kernel, taps=k, dil=dilation, tile_l=tile_l,
            l_out=l_out, t_per_split=tps, compute_dtype=compute_dtype)

    in_specs = [
        pl.BlockSpec((1, c_in, tile_l), lambda b, s, t: (b, 0, s * tps + t)),
        pl.BlockSpec((1, 1, c_in, halo), lambda b, s, t: (b, s * tps + t, 0, 0)),
    ]
    operands = [x_main, x_halo]
    if fused:
        in_specs += [pl.BlockSpec((c_in, 1), lambda b, s, t: (0, 0)),
                     pl.BlockSpec((c_in, 1), lambda b, s, t: (0, 0))]
        operands += [pre_scale, pre_shift]
    in_specs += [pl.BlockSpec((c_out, k * c_in), lambda b, s, t: (0, 0))]
    operands += [w_flat]

    flops = 2 * n * l_main * (k * c_in) * c_out
    bytes_accessed = int(
        x_main.size * x_main.dtype.itemsize
        + x_halo.size * x_halo.dtype.itemsize
        + w_flat.size * w_flat.dtype.itemsize
        + n * c_out * l_main * jnp.dtype(storage_dtype).itemsize
        + n * n_split * c_out * 2 * 4)

    y, stats = pl.pallas_call(
        kern,
        out_shape=(jax.ShapeDtypeStruct((n, c_out, l_main), storage_dtype),
                   jax.ShapeDtypeStruct((n, n_split, c_out, 2), jnp.float32)),
        grid=(n, n_split, tps),
        in_specs=in_specs,
        out_specs=(
            pl.BlockSpec((1, c_out, tile_l), lambda b, s, t: (b, 0, s * tps + t)),
            pl.BlockSpec((1, 1, c_out, 2), lambda b, s, t: (b, s, 0, 0)),
        ),
        compiler_params=pltpu.CompilerParams(
            dimension_semantics=("parallel", "parallel", "arbitrary"),
            vmem_limit_bytes=32 * 1024 * 1024),
        cost_estimate=pl.CostEstimate(flops=flops, transcendentals=0,
                                      bytes_accessed=bytes_accessed),
    )(*operands)
    return y, stats


def _fold_bn(stats, gamma, beta, count, eps):
    # NOTE: E[y^2] - E[y]^2 in f32 (sums come from the f32 conv accumulator);
    # a Welford/centered pass would be safer for extreme activation magnitudes.
    total = jnp.sum(stats, axis=(0, 1))                         # (C_out, 2)
    mean = total[:, 0] / count
    var = jnp.maximum(total[:, 1] / count - mean * mean, 0.0)   # biased variance
    scale = gamma * jax.lax.rsqrt(var + eps)
    shift = beta - mean * scale
    return (scale.astype(jnp.float32).reshape(-1, 1),
            shift.astype(jnp.float32).reshape(-1, 1))


def _bn_act_pass(y_pad, scale, shift, *, tile_l, neg_slope):
    n, c_out, l_main = y_pad.shape
    t_tiles = l_main // tile_l
    return pl.pallas_call(
        functools.partial(_bn_act_kernel, neg_slope=neg_slope),
        out_shape=jax.ShapeDtypeStruct((n, c_out, l_main), jnp.float32),
        grid=(n, t_tiles),
        in_specs=[pl.BlockSpec((1, c_out, tile_l), lambda b, t: (b, 0, t)),
                  pl.BlockSpec((c_out, 1), lambda b, t: (0, 0)),
                  pl.BlockSpec((c_out, 1), lambda b, t: (0, 0))],
        out_specs=pl.BlockSpec((1, c_out, tile_l), lambda b, t: (b, 0, t)),
        compiler_params=pltpu.CompilerParams(
            dimension_semantics=("parallel", "parallel"),
            vmem_limit_bytes=32 * 1024 * 1024),
    )(y_pad, scale, shift)


# --------------------------------------------------------------------------
# Full TCNBlock forward
# --------------------------------------------------------------------------
def tcn_block_forward(x, params, *, kernel_size=5, dilation=1, eps=1e-5,
                      neg_slope=0.01, max_tile_l=1024,
                      compute_dtype=jnp.bfloat16, storage_dtype=jnp.bfloat16):
    """x: (N, C_in, L) float32 -> (N, C_out, L - 2*(K-1)*dilation) float32."""
    w1, b1, w2, b2, gamma, beta = params
    del b1, b2  # batch-statistics BatchNorm cancels per-channel conv bias exactly
    n, _, l_in = x.shape
    k = kernel_size
    halo = (k - 1) * dilation
    assert halo >= 1, "kernel_size=1 path not implemented"
    l_out1 = l_in - halo
    l_out2 = l_out1 - halo
    assert l_out2 >= 1
    assert max_tile_l % 128 == 0

    # One shared L tile for both layers (keeps carried activations pad-free).
    if l_out1 <= max_tile_l:
        tile_l = l_out1
    else:
        n_t = pl.cdiv(l_out1, max_tile_l)
        tile_l = ((pl.cdiv(l_out1, n_t) + 127) // 128) * 128

    common = dict(tile_l=tile_l, kernel_size=k, dilation=dilation,
                  neg_slope=neg_slope, compute_dtype=compute_dtype,
                  storage_dtype=storage_dtype)

    # Layer 1: conv1 + BN1 partial stats (activation stored in storage_dtype).
    y1, stats1 = _conv_pass(x, l_in, w1, None, None, **common)
    scale1, shift1 = _fold_bn(stats1, gamma, beta, n * l_out1, eps)

    # Layer 2: BN1 + LeakyReLU fused into conv2; BN2 partial stats.
    y2, stats2 = _conv_pass(y1, l_out1, w2, scale1, shift1, **common)
    scale2, shift2 = _fold_bn(stats2, gamma, beta, n * l_out2, eps)

    # Final folded BN2 + LeakyReLU, then one slice to the true output length.
    out_pad = _bn_act_pass(y2, scale2, shift2, tile_l=tile_l, neg_slope=neg_slope)
    return out_pad[:, :, :l_out2]


# --------------------------------------------------------------------------
# Plain-JAX reference (for verification)
# --------------------------------------------------------------------------
def _reference_forward(x, params, *, kernel_size=5, dilation=1,
                       eps=1e-5, neg_slope=0.01):
    w1, b1, w2, b2, gamma, beta = params

    def conv1d(inp, w, b):
        out = jax.lax.conv_general_dilated(
            inp, w, window_strides=(1,), padding='VALID',
            rhs_dilation=(dilation,),
            dimension_numbers=('NCH', 'OIH', 'NCH'))
        return out + b[None, :, None]

    def bn_act(y):
        mean = jnp.mean(y, axis=(0, 2), keepdims=True)
        var = jnp.mean((y - mean) ** 2, axis=(0, 2), keepdims=True)
        z = gamma[None, :, None] * (y - mean) * jax.lax.rsqrt(var + eps) \
            + beta[None, :, None]
        return jnp.where(z >= 0, z, neg_slope * z)

    h = bn_act(conv1d(x, w1, b1))
    return bn_act(conv1d(h, w2, b2))


# --------------------------------------------------------------------------
# Deterministic parameter init (shapes from TCNBlock.__init__)
# --------------------------------------------------------------------------
def init_params(key, in_channels, out_channels, kernel_size):
    k1, k2, k3, k4 = jax.random.split(key, 4)
    scale1 = 1.0 / (in_channels * kernel_size) ** 0.5
    scale2 = 1.0 / (out_channels * kernel_size) ** 0.5
    w1 = jax.random.uniform(k1, (out_channels, in_channels, kernel_size),
                            jnp.float32, -scale1, scale1)
    b1 = jax.random.uniform(k2, (out_channels,), jnp.float32, -scale1, scale1)
    w2 = jax.random.uniform(k3, (out_channels, out_channels, kernel_size),
                            jnp.float32, -scale2, scale2)
    b2 = jax.random.uniform(k4, (out_channels,), jnp.float32, -scale2, scale2)
    gamma = jnp.ones((out_channels,), jnp.float32)   # shared BatchNorm1d affine
    beta = jnp.zeros((out_channels,), jnp.float32)
    return (w1, b1, w2, b2, gamma, beta)


if __name__ == "__main__":
    def _check(n, c_in, c_out, L, k, dil, compute_dtype, storage_dtype,
               atol, rtol, tag):
        key = jax.random.PRNGKey(0)
        kx, kp = jax.random.split(key)
        x = jax.random.normal(kx, (n, c_in, L), jnp.float32)
        params = init_params(kp, c_in, c_out, k)
        fwd = jax.jit(functools.partial(
            tcn_block_forward, kernel_size=k, dilation=dil,
            compute_dtype=compute_dtype, storage_dtype=storage_dtype))
        out = jax.block_until_ready(fwd(x, params))
        ref = _reference_forward(x, params, kernel_size=k, dilation=dil)
        assert out.shape == (n, c_out, L - 2 * (k - 1) * dil), (tag, out.shape)
        err = float(jnp.max(jnp.abs(out - ref)))
        assert jnp.allclose(out, ref, atol=atol, rtol=rtol), (tag, err)

    # Small shapes implied by the module (batch=2, channels 4->8, length 16).
    _check(2, 4, 8, 16, 5, 1, jnp.float32, jnp.float32, 1e-4, 1e-4, "small-f32")
    _check(2, 4, 8, 16, 5, 1, jnp.bfloat16, jnp.bfloat16, 8e-2, 5e-2, "small-bf16")
    # Larger run: multi-tile grid, megacore L-split, ragged masked tile, fusion.
    _check(1, 8, 16, 2052, 5, 1, jnp.float32, jnp.float32, 1e-3, 1e-3, "large-f32")
    _check(1, 8, 16, 2052, 5, 1, jnp.bfloat16, jnp.bfloat16, 8e-2, 5e-2, "large-bf16")

    print("KERNEL_OK")
</pallas_src>

<mosaic_0001>
module attributes {stable_mosaic.version = 11 : i64} {
  func.func @_conv_stats_kernel(%arg0: i32, %arg1: i32, %arg2: i32, %arg3: memref<1x4x12xf32, #tpu.memory_space<vmem>>, %arg4: memref<1x1x4x4xf32, #tpu.memory_space<vmem>>, %arg5: memref<8x20xf32, #tpu.memory_space<vmem>>, %arg6: memref<1x8x12xf32, #tpu.memory_space<vmem>>, %arg7: memref<1x1x8x2xf32, #tpu.memory_space<vmem>>) attributes {dimension_semantics = [#tpu.dimension_semantics<parallel>, #tpu.dimension_semantics<parallel>, #tpu.dimension_semantics<arbitrary>], iteration_bounds = array<i64: 2, 1, 1>, scalar_prefetch = 0 : i64, scratch_operands = 0 : i64, tpu.core_type = #tpu.core_type<tc>, window_params = [{transform_indices = @transform_0, window_bounds = array<i64: 1, 4, 12>}, {transform_indices = @transform_1, window_bounds = array<i64: 1, 1, 4, 4>}, {pipeline_mode = #tpu.pipeline_mode<synchronous>, transform_indices = @transform_2, window_bounds = array<i64: 8, 20>}, {transform_indices = @transform_3, window_bounds = array<i64: 1, 8, 12>}, {transform_indices = @transform_4, window_bounds = array<i64: 1, 1, 8, 2>}]} {
    %c0 = arith.constant 0 : index
    %c0_0 = arith.constant 0 : index
    %c0_1 = arith.constant 0 : index
    %0 = vector.load %arg3[%c0, %c0_0, %c0_1] : memref<1x4x12xf32, #tpu.memory_space<vmem>>, vector<1x4x12xf32>
    %1 = vector.shape_cast %0 : vector<1x4x12xf32> to vector<4x12xf32>
    %c0_2 = arith.constant 0 : index
    %c0_3 = arith.constant 0 : index
    %c0_4 = arith.constant 0 : index
    %c0_5 = arith.constant 0 : index
    %2 = vector.load %arg4[%c0_2, %c0_3, %c0_4, %c0_5] : memref<1x1x4x4xf32, #tpu.memory_space<vmem>>, vector<1x1x4x4xf32>
    %3 = vector.shape_cast %2 : vector<1x1x4x4xf32> to vector<4x4xf32>
    %4 = tpu.concatenate %1, %3 in 1 : vector<4x12xf32>, vector<4x4xf32> -> vector<4x16xf32>
    %c1_i32 = arith.constant 1 : i32
    %5 = arith.muli %arg1, %c1_i32 : i32
    %6 = arith.addi %5, %arg2 : i32
    %7 = vector.extract_strided_slice %4 {offsets = [0, 0], sizes = [4, 12], strides = [1, 1]} : vector<4x16xf32> to vector<4x12xf32>
    %8 = vector.extract_strided_slice %4 {offsets = [0, 1], sizes = [4, 12], strides = [1, 1]} : vector<4x16xf32> to vector<4x12xf32>
    %9 = vector.extract_strided_slice %4 {offsets = [0, 2], sizes = [4, 12], strides = [1, 1]} : vector<4x16xf32> to vector<4x12xf32>
    %10 = vector.extract_strided_slice %4 {offsets = [0, 3], sizes = [4, 12], strides = [1, 1]} : vector<4x16xf32> to vector<4x12xf32>
    %11 = vector.extract_strided_slice %4 {offsets = [0, 4], sizes = [4, 12], strides = [1, 1]} : vector<4x16xf32> to vector<4x12xf32>
    %12 = tpu.concatenate %7, %8, %9, %10, %11 in 0 : vector<4x12xf32>, vector<4x12xf32>, vector<4x12xf32>, vector<4x12xf32>, vector<4x12xf32> -> vector<20x12xf32>
    %c0_6 = arith.constant 0 : index
    %c0_7 = arith.constant 0 : index
    %13 = vector.load %arg5[%c0_6, %c0_7] : memref<8x20xf32, #tpu.memory_space<vmem>>, vector<8x20xf32>
    %cst = arith.constant dense<0.000000e+00> : vector<8x12xf32>
    %14 = tpu.matmul %13, %12, %cst {dimension_numbers = #tpu.dot_dimension_numbers<[1], [0], [0], [1], [0, 0, 1, 1], [], []>} : vector<8x20xf32>, vector<20x12xf32>, vector<8x12xf32> -> vector<8x12xf32>
    %c0_8 = arith.constant 0 : index
    %c0_9 = arith.constant 0 : index
    %c0_10 = arith.constant 0 : index
    %15 = vector.load %arg6[%c0_8, %c0_9, %c0_10] : memref<1x8x12xf32, #tpu.memory_space<vmem>>, vector<1x8x12xf32>
    %16 = vector.shape_cast %15 : vector<1x8x12xf32> to vector<8x12xf32>
    %17 = vector.shape_cast %14 : vector<8x12xf32> to vector<1x8x12xf32>
    tpu.vector_store %arg6[%c0_8, %c0_9, %c0_10], %17 {strides = array<i32>} : memref<1x8x12xf32, #tpu.memory_space<vmem>>, vector<1x8x12xf32>,
    %c0_i32 = arith.constant 0 : i32
    %18 = arith.cmpi eq, %arg2, %c0_i32 : i32
    %19 = arith.extui %18 : i1 to i32
    %c0_i32_11 = arith.constant 0 : i32
    %20 = arith.cmpi ne, %19, %c0_i32_11 : i32
    scf.if %20 {
      %cst_16 = arith.constant 0.000000e+00 : f32
      %29 = vector.broadcast %cst_16 : f32 to vector<1x1x8x2xf32>
      %c0_17 = arith.constant 0 : index
      %c0_18 = arith.constant 0 : index
      %c0_19 = arith.constant 0 : index
      %c0_20 = arith.constant 0 : index
      %30 = vector.load %arg7[%c0_17, %c0_18, %c0_19, %c0_20] : memref<1x1x8x2xf32, #tpu.memory_space<vmem>>, vector<1x1x8x2xf32>
      tpu.vector_store %arg7[%c0_17, %c0_18, %c0_19, %c0_20], %29 {strides = array<i32>} : memref<1x1x8x2xf32, #tpu.memory_space<vmem>>, vector<1x1x8x2xf32>,
    } else {
    }
    %c1_i32_12 = arith.constant 1 : i32
    %21 = arith.addi %6, %c1_i32_12 : i32
    %c12_i32 = arith.constant 12 : i32
    %22 = arith.muli %21, %c12_i32 : i32
    %c12_i32_13 = arith.constant 12 : i32
    %23 = arith.cmpi sle, %22, %c12_i32_13 : i32
    %24 = arith.extui %23 : i1 to i32
    %c0_i32_14 = arith.constant 0 : i32
    %25 = arith.cmpi ne, %24, %c0_i32_14 : i32
    scf.if %25 {
      %cst_16 = arith.constant dense<0.000000e+00> : vector<8xf32>
      %29 = vector.multi_reduction <add>, %14, %cst_16 [1] : vector<8x12xf32> to vector<8xf32>
      %30 = vector.shape_cast %29 : vector<8xf32> to vector<8x1xf32>
      %31 = arith.mulf %14, %14 : vector<8x12xf32>
      %cst_17 = arith.constant dense<0.000000e+00> : vector<8xf32>
      %32 = vector.multi_reduction <add>, %31, %cst_17 [1] : vector<8x12xf32> to vector<8xf32>
      %33 = vector.shape_cast %32 : vector<8xf32> to vector<8x1xf32>
      %34 = tpu.concatenate %30, %33 in 1 : vector<8x1xf32>, vector<8x1xf32> -> vector<8x2xf32>
      %c0_18 = arith.constant 0 : index
      %c0_19 = arith.constant 0 : index
      %c0_20 = arith.constant 0 : index
      %c0_21 = arith.constant 0 : index
      %35 = vector.load %arg7[%c0_18, %c0_19, %c0_20, %c0_21] : memref<1x1x8x2xf32, #tpu.memory_space<vmem>>, vector<1x1x8x2xf32>
      %36 = vector.shape_cast %35 : vector<1x1x8x2xf32> to vector<8x2xf32>
      %37 = arith.addf %36, %34 : vector<8x2xf32>
      %c0_22 = arith.constant 0 : index
      %c0_23 = arith.constant 0 : index
      %c0_24 = arith.constant 0 : index
      %c0_25 = arith.constant 0 : index
      %38 = vector.load %arg7[%c0_22, %c0_23, %c0_24, %c0_25] : memref<1x1x8x2xf32, #tpu.memory_space<vmem>>, vector<1x1x8x2xf32>
      %39 = vector.shape_cast %38 : vector<1x1x8x2xf32> to vector<8x2xf32>
      %40 = vector.shape_cast %37 : vector<8x2xf32> to vector<1x1x8x2xf32>
      tpu.vector_store %arg7[%c0_22, %c0_23, %c0_24, %c0_25], %40 {strides = array<i32>} : memref<1x1x8x2xf32, #tpu.memory_space<vmem>>, vector<1x1x8x2xf32>,
    } else {
    }
    %true = arith.constant true
    %26 = arith.xori %23, %true : i1
    %27 = arith.extui %26 : i1 to i32
    %c0_i32_15 = arith.constant 0 : i32
    %28 = arith.cmpi ne, %27, %c0_i32_15 : i32
    scf.if %28 {
      %29 = tpu.iota {dimensions = array<i32: 1>} : vector<8x12xi32>
      %c12_i32_16 = arith.constant 12 : i32
      %30 = arith.muli %6, %c12_i32_16 : i32
      %31 = vector.broadcast %30 : i32 to vector<8x12xi32>
      %32 = arith.addi %31, %29 : vector<8x12xi32>
      %c12_i32_17 = arith.constant 12 : i32
      %33 = vector.broadcast %c12_i32_17 : i32 to vector<8x12xi32>
      %34 = arith.cmpi slt, %32, %33 : vector<8x12xi32>
      %cst_18 = arith.constant 0.000000e+00 : f32
      %35 = vector.broadcast %cst_18 : f32 to vector<8x12xf32>
      %36 = arith.select %34, %14, %35 : vector<8x12xi1>, vector<8x12xf32>
      %cst_19 = arith.constant dense<0.000000e+00> : vector<8xf32>
      %37 = vector.multi_reduction <add>, %36, %cst_19 [1] : vector<8x12xf32> to vector<8xf32>
      %38 = vector.shape_cast %37 : vector<8xf32> to vector<8x1xf32>
      %39 = arith.mulf %36, %36 : vector<8x12xf32>
      %cst_20 = arith.constant dense<0.000000e+00> : vector<8xf32>
      %40 = vector.multi_reduction <add>, %39, %cst_20 [1] : vector<8x12xf32> to vector<8xf32>
      %41 = vector.shape_cast %40 : vector<8xf32> to vector<8x1xf32>
      %42 = tpu.concatenate %38, %41 in 1 : vector<8x1xf32>, vector<8x1xf32> -> vector<8x2xf32>
      %c0_21 = arith.constant 0 : index
      %c0_22 = arith.constant 0 : index
      %c0_23 = arith.constant 0 : index
      %c0_24 = arith.constant 0 : index
      %43 = vector.load %arg7[%c0_21, %c0_22, %c0_23, %c0_24] : memref<1x1x8x2xf32, #tpu.memory_space<vmem>>, vector<1x1x8x2xf32>
      %44 = vector.shape_cast %43 : vector<1x1x8x2xf32> to vector<8x2xf32>
      %45 = arith.addf %44, %42 : vector<8x2xf32>
      %c0_25 = arith.constant 0 : index
      %c0_26 = arith.constant 0 : index
      %c0_27 = arith.constant 0 : index
      %c0_28 = arith.constant 0 : index
      %46 = vector.load %arg7[%c0_25, %c0_26, %c0_27, %c0_28] : memref<1x1x8x2xf32, #tpu.memory_space<vmem>>, vector<1x1x8x2xf32>
      %47 = vector.shape_cast %46 : vector<1x1x8x2xf32> to vector<8x2xf32>
      %48 = vector.shape_cast %45 : vector<8x2xf32> to vector<1x1x8x2xf32>
      tpu.vector_store %arg7[%c0_25, %c0_26, %c0_27, %c0_28], %48 {strides = array<i32>} : memref<1x1x8x2xf32, #tpu.memory_space<vmem>>, vector<1x1x8x2xf32>,
    } else {
    }
    return
  }
  func.func @transform_0(%arg0: i32, %arg1: i32, %arg2: i32) -> (i32, i32, i32) {
    %c1_i32 = arith.constant 1 : i32
    %0 = arith.muli %arg1, %c1_i32 : i32
    %1 = arith.addi %0, %arg2 : i32
    %c0_i32 = arith.constant 0 : i32
    %c0_i32_0 = arith.constant 0 : i32
    return %arg0, %c0_i32, %1 : i32, i32, i32
  }
  func.func @transform_1(%arg0: i32, %arg1: i32, %arg2: i32) -> (i32, i32, i32, i32) {
    %c1_i32 = arith.constant 1 : i32
    %0 = arith.muli %arg1, %c1_i32 : i32
    %1 = arith.addi %0, %arg2 : i32
    %c0_i32 = arith.constant 0 : i32
    %c0_i32_0 = arith.constant 0 : i32
    %c0_i32_1 = arith.constant 0 : i32
    return %arg0, %1, %c0_i32, %c0_i32_0 : i32, i32, i32, i32
  }
  func.func @transform_2(%arg0: i32, %arg1: i32, %arg2: i32) -> (i32, i32) {
    %c0_i32 = arith.constant 0 : i32
    %c0_i32_0 = arith.constant 0 : i32
    %c0_i32_1 = arith.constant 0 : i32
    return %c0_i32, %c0_i32_0 : i32, i32
  }
  func.func @transform_3(%arg0: i32, %arg1: i32, %arg2: i32) -> (i32, i32, i32) {
    %c1_i32 = arith.constant 1 : i32
    %0 = arith.muli %arg1, %c1_i32 : i32
    %1 = arith.addi %0, %arg2 : i32
    %c0_i32 = arith.constant 0 : i32
    %c0_i32_0 = arith.constant 0 : i32
    return %arg0, %c0_i32, %1 : i32, i32, i32
  }
  func.func @transform_4(%arg0: i32, %arg1: i32, %arg2: i32) -> (i32, i32, i32, i32) {
    %c0_i32 = arith.constant 0 : i32
    %c0_i32_0 = arith.constant 0 : i32
    %c0_i32_1 = arith.constant 0 : i32
    return %arg0, %arg1, %c0_i32, %c0_i32_0 : i32, i32, i32, i32
  }
}

module attributes {stable_mosaic.version = 11 : i64} {
  func.func @_bn_act_kernel(%arg0: i32, %arg1: i32, %arg2: memref<1x8x12xf32, #tpu.memory_space<vmem>>, %arg3: memref<8x1xf32, #tpu.memory_space<vmem>>, %arg4: memref<8x1xf32, #tpu.memory_space<vmem>>, %arg5: memref<1x8x12xf32, #tpu.memory_space<vmem>>) attributes {dimension_semantics = [#tpu.dimension_semantics<parallel>, #tpu.dimension_semantics<parallel>], iteration_bounds = array<i64: 2, 1>, scalar_prefetch = 0 : i64, scratch_operands = 0 : i64, tpu.core_type = #tpu.core_type<tc>, window_params = [{transform_indices = @transform_0, window_bounds = array<i64: 1, 8, 12>}, {pipeline_mode = #tpu.pipeline_mode<synchronous>, transform_indices = @transform_1, window_bounds = array<i64: 8, 1>}, {pipeline_mode = #tpu.pipeline_mode<synchronous>, transform_indices = @transform_2, window_bounds = array<i64: 8, 1>}, {transform_indices = @transform_3, window_bounds = array<i64: 1, 8, 12>}]} {
    %c0 = arith.constant 0 : index
    %c0_0 = arith.constant 0 : index
    %c0_1 = arith.constant 0 : index
    %0 = vector.load %arg2[%c0, %c0_0, %c0_1] : memref<1x8x12xf32, #tpu.memory_space<vmem>>, vector<1x8x12xf32>
    %1 = vector.shape_cast %0 : vector<1x8x12xf32> to vector<8x12xf32>
    %c0_2 = arith.constant 0 : index
    %c0_3 = arith.constant 0 : index
    %2 = vector.load %arg3[%c0_2, %c0_3] : memref<8x1xf32, #tpu.memory_space<vmem>>, vector<8x1xf32>
    %3 = vector.broadcast %2 : vector<8x1xf32> to vector<8x12xf32>
    %4 = arith.mulf %1, %3 : vector<8x12xf32>
    %c0_4 = arith.constant 0 : index
    %c0_5 = arith.constant 0 : index
    %5 = vector.load %arg4[%c0_4, %c0_5] : memref<8x1xf32, #tpu.memory_space<vmem>>, vector<8x1xf32>
    %6 = vector.broadcast %5 : vector<8x1xf32> to vector<8x12xf32>
    %7 = arith.addf %4, %6 : vector<8x12xf32>
    %cst = arith.constant 0.000000e+00 : f32
    %8 = vector.broadcast %cst : f32 to vector<8x12xf32>
    %9 = arith.cmpf oge, %7, %8 : vector<8x12xf32>
    %cst_6 = arith.constant 0.00999999977 : f32
    %10 = vector.broadcast %cst_6 : f32 to vector<8x12xf32>
    %11 = arith.mulf %10, %7 : vector<8x12xf32>
    %12 = arith.select %9, %7, %11 : vector<8x12xi1>, vector<8x12xf32>
    %c0_7 = arith.constant 0 : index
    %c0_8 = arith.constant 0 : index
    %c0_9 = arith.constant 0 : index
    %13 = vector.load %arg5[%c0_7, %c0_8, %c0_9] : memref<1x8x12xf32, #tpu.memory_space<vmem>>, vector<1x8x12xf32>
    %14 = vector.shape_cast %13 : vector<1x8x12xf32> to vector<8x12xf32>
    %15 = vector.shape_cast %12 : vector<8x12xf32> to vector<1x8x12xf32>
    tpu.vector_store %arg5[%c0_7, %c0_8, %c0_9], %15 {strides = array<i32>} : memref<1x8x12xf32, #tpu.memory_space<vmem>>, vector<1x8x12xf32>,
    return
  }
  func.func @transform_0(%arg0: i32, %arg1: i32) -> (i32, i32, i32) {
    %c0_i32 = arith.constant 0 : i32
    %c0_i32_0 = arith.constant 0 : i32
    return %arg0, %c0_i32, %arg1 : i32, i32, i32
  }
  func.func @transform_1(%arg0: i32, %arg1: i32) -> (i32, i32) {
    %c0_i32 = arith.constant 0 : i32
    %c0_i32_0 = arith.constant 0 : i32
    %c0_i32_1 = arith.constant 0 : i32
    return %c0_i32, %c0_i32_0 : i32, i32
  }
  func.func @transform_2(%arg0: i32, %arg1: i32) -> (i32, i32) {
    %c0_i32 = arith.constant 0 : i32
    %c0_i32_0 = arith.constant 0 : i32
    %c0_i32_1 = arith.constant 0 : i32
    return %c0_i32, %c0_i32_0 : i32, i32
  }
  func.func @transform_3(%arg0: i32, %arg1: i32) -> (i32, i32, i32) {
    %c0_i32 = arith.constant 0 : i32
    %c0_i32_0 = arith.constant 0 : i32
    return %arg0, %c0_i32, %arg1 : i32, i32, i32
  }
}

module attributes {stable_mosaic.version = 11 : i64} {
  func.func @_fused_conv_stats_kernel(%arg0: i32, %arg1: i32, %arg2: i32, %arg3: memref<1x8x12xf32, #tpu.memory_space<vmem>>, %arg4: memref<1x1x8x4xf32, #tpu.memory_space<vmem>>, %arg5: memref<8x1xf32, #tpu.memory_space<vmem>>, %arg6: memref<8x1xf32, #tpu.memory_space<vmem>>, %arg7: memref<8x40xf32, #tpu.memory_space<vmem>>, %arg8: memref<1x8x12xf32, #tpu.memory_space<vmem>>, %arg9: memref<1x1x8x2xf32, #tpu.memory_space<vmem>>) attributes {dimension_semantics = [#tpu.dimension_semantics<parallel>, #tpu.dimension_semantics<parallel>, #tpu.dimension_semantics<arbitrary>], iteration_bounds = array<i64: 2, 1, 1>, scalar_prefetch = 0 : i64, scratch_operands = 0 : i64, tpu.core_type = #tpu.core_type<tc>, window_params = [{transform_indices = @transform_0, window_bounds = array<i64: 1, 8, 12>}, {transform_indices = @transform_1, window_bounds = array<i64: 1, 1, 8, 4>}, {pipeline_mode = #tpu.pipeline_mode<synchronous>, transform_indices = @transform_2, window_bounds = array<i64: 8, 1>}, {pipeline_mode = #tpu.pipeline_mode<synchronous>, transform_indices = @transform_3, window_bounds = array<i64: 8, 1>}, {pipeline_mode = #tpu.pipeline_mode<synchronous>, transform_indices = @transform_4, window_bounds = array<i64: 8, 40>}, {transform_indices = @transform_5, window_bounds = array<i64: 1, 8, 12>}, {transform_indices = @transform_6, window_bounds = array<i64: 1, 1, 8, 2>}]} {
    %c0 = arith.constant 0 : index
    %c0_0 = arith.constant 0 : index
    %c0_1 = arith.constant 0 : index
    %0 = vector.load %arg3[%c0, %c0_0, %c0_1] : memref<1x8x12xf32, #tpu.memory_space<vmem>>, vector<1x8x12xf32>
    %1 = vector.shape_cast %0 : vector<1x8x12xf32> to vector<8x12xf32>
    %c0_2 = arith.constant 0 : index
    %c0_3 = arith.constant 0 : index
    %c0_4 = arith.constant 0 : index
    %c0_5 = arith.constant 0 : index
    %2 = vector.load %arg4[%c0_2, %c0_3, %c0_4, %c0_5] : memref<1x1x8x4xf32, #tpu.memory_space<vmem>>, vector<1x1x8x4xf32>
    %3 = vector.shape_cast %2 : vector<1x1x8x4xf32> to vector<8x4xf32>
    %4 = tpu.concatenate %1, %3 in 1 : vector<8x12xf32>, vector<8x4xf32> -> vector<8x16xf32>
    %c0_6 = arith.constant 0 : index
    %c0_7 = arith.constant 0 : index
    %5 = vector.load %arg5[%c0_6, %c0_7] : memref<8x1xf32, #tpu.memory_space<vmem>>, vector<8x1xf32>
    %6 = vector.broadcast %5 : vector<8x1xf32> to vector<8x16xf32>
    %7 = arith.mulf %4, %6 : vector<8x16xf32>
    %c0_8 = arith.constant 0 : index
    %c0_9 = arith.constant 0 : index
    %8 = vector.load %arg6[%c0_8, %c0_9] : memref<8x1xf32, #tpu.memory_space<vmem>>, vector<8x1xf32>
    %9 = vector.broadcast %8 : vector<8x1xf32> to vector<8x16xf32>
    %10 = arith.addf %7, %9 : vector<8x16xf32>
    %cst = arith.constant 0.000000e+00 : f32
    %11 = vector.broadcast %cst : f32 to vector<8x16xf32>
    %12 = arith.cmpf oge, %10, %11 : vector<8x16xf32>
    %cst_10 = arith.constant 0.00999999977 : f32
    %13 = vector.broadcast %cst_10 : f32 to vector<8x16xf32>
    %14 = arith.mulf %13, %10 : vector<8x16xf32>
    %15 = arith.select %12, %10, %14 : vector<8x16xi1>, vector<8x16xf32>
    %c1_i32 = arith.constant 1 : i32
    %16 = arith.muli %arg1, %c1_i32 : i32
    %17 = arith.addi %16, %arg2 : i32
    %18 = vector.extract_strided_slice %15 {offsets = [0, 0], sizes = [8, 12], strides = [1, 1]} : vector<8x16xf32> to vector<8x12xf32>
    %19 = vector.extract_strided_slice %15 {offsets = [0, 1], sizes = [8, 12], strides = [1, 1]} : vector<8x16xf32> to vector<8x12xf32>
    %20 = vector.extract_strided_slice %15 {offsets = [0, 2], sizes = [8, 12], strides = [1, 1]} : vector<8x16xf32> to vector<8x12xf32>
    %21 = vector.extract_strided_slice %15 {offsets = [0, 3], sizes = [8, 12], strides = [1, 1]} : vector<8x16xf32> to vector<8x12xf32>
    %22 = vector.extract_strided_slice %15 {offsets = [0, 4], sizes = [8, 12], strides = [1, 1]} : vector<8x16xf32> to vector<8x12xf32>
    %23 = tpu.concatenate %18, %19, %20, %21, %22 in 0 : vector<8x12xf32>, vector<8x12xf32>, vector<8x12xf32>, vector<8x12xf32>, vector<8x12xf32> -> vector<40x12xf32>
    %c0_11 = arith.constant 0 : index
    %c0_12 = arith.constant 0 : index
    %24 = vector.load %arg7[%c0_11, %c0_12] : memref<8x40xf32, #tpu.memory_space<vmem>>, vector<8x40xf32>
    %cst_13 = arith.constant dense<0.000000e+00> : vector<8x12xf32>
    %25 = tpu.matmul %24, %23, %cst_13 {dimension_numbers = #tpu.dot_dimension_numbers<[1], [0], [0], [1], [0, 0, 1, 1], [], []>} : vector<8x40xf32>, vector<40x12xf32>, vector<8x12xf32> -> vector<8x12xf32>
    %c0_14 = arith.constant 0 : index
    %c0_15 = arith.constant 0 : index
    %c0_16 = arith.constant 0 : index
    %26 = vector.load %arg8[%c0_14, %c0_15, %c0_16] : memref<1x8x12xf32, #tpu.memory_space<vmem>>, vector<1x8x12xf32>
    %27 = vector.shape_cast %26 : vector<1x8x12xf32> to vector<8x12xf32>
    %28 = vector.shape_cast %25 : vector<8x12xf32> to vector<1x8x12xf32>
    tpu.vector_store %arg8[%c0_14, %c0_15, %c0_16], %28 {strides = array<i32>} : memref<1x8x12xf32, #tpu.memory_space<vmem>>, vector<1x8x12xf32>,
    %c0_i32 = arith.constant 0 : i32
    %29 = arith.cmpi eq, %arg2, %c0_i32 : i32
    %30 = arith.extui %29 : i1 to i32
    %c0_i32_17 = arith.constant 0 : i32
    %31 = arith.cmpi ne, %30, %c0_i32_17 : i32
    scf.if %31 {
      %cst_21 = arith.constant 0.000000e+00 : f32
      %40 = vector.broadcast %cst_21 : f32 to vector<1x1x8x2xf32>
      %c0_22 = arith.constant 0 : index
      %c0_23 = arith.constant 0 : index
      %c0_24 = arith.constant 0 : index
      %c0_25 = arith.constant 0 : index
      %41 = vector.load %arg9[%c0_22, %c0_23, %c0_24, %c0_25] : memref<1x1x8x2xf32, #tpu.memory_space<vmem>>, vector<1x1x8x2xf32>
      tpu.vector_store %arg9[%c0_22, %c0_23, %c0_24, %c0_25], %40 {strides = array<i32>} : memref<1x1x8x2xf32, #tpu.memory_space<vmem>>, vector<1x1x8x2xf32>,
    } else {
    }
    %c1_i32_18 = arith.constant 1 : i32
    %32 = arith.addi %17, %c1_i32_18 : i32
    %c12_i32 = arith.constant 12 : i32
    %33 = arith.muli %32, %c12_i32 : i32
    %c8_i32 = arith.constant 8 : i32
    %34 = arith.cmpi sle, %33, %c8_i32 : i32
    %35 = arith.extui %34 : i1 to i32
    %c0_i32_19 = arith.constant 0 : i32
    %36 = arith.cmpi ne, %35, %c0_i32_19 : i32
    scf.if %36 {
      %cst_21 = arith.constant dense<0.000000e+00> : vector<8xf32>
      %40 = vector.multi_reduction <add>, %25, %cst_21 [1] : vector<8x12xf32> to vector<8xf32>
      %41 = vector.shape_cast %40 : vector<8xf32> to vector<8x1xf32>
      %42 = arith.mulf %25, %25 : vector<8x12xf32>
      %cst_22 = arith.constant dense<0.000000e+00> : vector<8xf32>
      %43 = vector.multi_reduction <add>, %42, %cst_22 [1] : vector<8x12xf32> to vector<8xf32>
      %44 = vector.shape_cast %43 : vector<8xf32> to vector<8x1xf32>
      %45 = tpu.concatenate %41, %44 in 1 : vector<8x1xf32>, vector<8x1xf32> -> vector<8x2xf32>
      %c0_23 = arith.constant 0 : index
      %c0_24 = arith.constant 0 : index
      %c0_25 = arith.constant 0 : index
      %c0_26 = arith.constant 0 : index
      %46 = vector.load %arg9[%c0_23, %c0_24, %c0_25, %c0_26] : memref<1x1x8x2xf32, #tpu.memory_space<vmem>>, vector<1x1x8x2xf32>
      %47 = vector.shape_cast %46 : vector<1x1x8x2xf32> to vector<8x2xf32>
      %48 = arith.addf %47, %45 : vector<8x2xf32>
      %c0_27 = arith.constant 0 : index
      %c0_28 = arith.constant 0 : index
      %c0_29 = arith.constant 0 : index
      %c0_30 = arith.constant 0 : index
      %49 = vector.load %arg9[%c0_27, %c0_28, %c0_29, %c0_30] : memref<1x1x8x2xf32, #tpu.memory_space<vmem>>, vector<1x1x8x2xf32>
      %50 = vector.shape_cast %49 : vector<1x1x8x2xf32> to vector<8x2xf32>
      %51 = vector.shape_cast %48 : vector<8x2xf32> to vector<1x1x8x2xf32>
      tpu.vector_store %arg9[%c0_27, %c0_28, %c0_29, %c0_30], %51 {strides = array<i32>} : memref<1x1x8x2xf32, #tpu.memory_space<vmem>>, vector<1x1x8x2xf32>,
    } else {
    }
    %true = arith.constant true
    %37 = arith.xori %34, %true : i1
    %38 = arith.extui %37 : i1 to i32
    %c0_i32_20 = arith.constant 0 : i32
    %39 = arith.cmpi ne, %38, %c0_i32_20 : i32
    scf.if %39 {
      %40 = tpu.iota {dimensions = array<i32: 1>} : vector<8x12xi32>
      %c12_i32_21 = arith.constant 12 : i32
      %41 = arith.muli %17, %c12_i32_21 : i32
      %42 = vector.broadcast %41 : i32 to vector<8x12xi32>
      %43 = arith.addi %42, %40 : vector<8x12xi32>
      %c8_i32_22 = arith.constant 8 : i32
      %44 = vector.broadcast %c8_i32_22 : i32 to vector<8x12xi32>
      %45 = arith.cmpi slt, %43, %44 : vector<8x12xi32>
      %cst_23 = arith.constant 0.000000e+00 : f32
      %46 = vector.broadcast %cst_23 : f32 to vector<8x12xf32>
      %47 = arith.select %45, %25, %46 : vector<8x12xi1>, vector<8x12xf32>
      %cst_24 = arith.constant dense<0.000000e+00> : vector<8xf32>
      %48 = vector.multi_reduction <add>, %47, %cst_24 [1] : vector<8x12xf32> to vector<8xf32>
      %49 = vector.shape_cast %48 : vector<8xf32> to vector<8x1xf32>
      %50 = arith.mulf %47, %47 : vector<8x12xf32>
      %cst_25 = arith.constant dense<0.000000e+00> : vector<8xf32>
      %51 = vector.multi_reduction <add>, %50, %cst_25 [1] : vector<8x12xf32> to vector<8xf32>
      %52 = vector.shape_cast %51 : vector<8xf32> to vector<8x1xf32>
      %53 = tpu.concatenate %49, %52 in 1 : vector<8x1xf32>, vector<8x1xf32> -> vector<8x2xf32>
      %c0_26 = arith.constant 0 : index
      %c0_27 = arith.constant 0 : index
      %c0_28 = arith.constant 0 : index
      %c0_29 = arith.constant 0 : index
      %54 = vector.load %arg9[%c0_26, %c0_27, %c0_28, %c0_29] : memref<1x1x8x2xf32, #tpu.memory_space<vmem>>, vector<1x1x8x2xf32>
      %55 = vector.shape_cast %54 : vector<1x1x8x2xf32> to vector<8x2xf32>
      %56 = arith.addf %55, %53 : vector<8x2xf32>
      %c0_30 = arith.constant 0 : index
      %c0_31 = arith.constant 0 : index
      %c0_32 = arith.constant 0 : index
      %c0_33 = arith.constant 0 : index
      %57 = vector.load %arg9[%c0_30, %c0_31, %c0_32, %c0_33] : memref<1x1x8x2xf32, #tpu.memory_space<vmem>>, vector<1x1x8x2xf32>
      %58 = vector.shape_cast %57 : vector<1x1x8x2xf32> to vector<8x2xf32>
      %59 = vector.shape_cast %56 : vector<8x2xf32> to vector<1x1x8x2xf32>
      tpu.vector_store %arg9[%c0_30, %c0_31, %c0_32, %c0_33], %59 {strides = array<i32>} : memref<1x1x8x2xf32, #tpu.memory_space<vmem>>, vector<1x1x8x2xf32>,
    } else {
    }
    return
  }
  func.func @transform_0(%arg0: i32, %arg1: i32, %arg2: i32) -> (i32, i32, i32) {
    %c1_i32 = arith.constant 1 : i32
    %0 = arith.muli %arg1, %c1_i32 : i32
    %1 = arith.addi %0, %arg2 : i32
    %c0_i32 = arith.constant 0 : i32
    %c0_i32_0 = arith.constant 0 : i32
    return %arg0, %c0_i32, %1 : i32, i32, i32
  }
  func.func @transform_1(%arg0: i32, %arg1: i32, %arg2: i32) -> (i32, i32, i32, i32) {
    %c1_i32 = arith.constant 1 : i32
    %0 = arith.muli %arg1, %c1_i32 : i32
    %1 = arith.addi %0, %arg2 : i32
    %c0_i32 = arith.constant 0 : i32
    %c0_i32_0 = arith.constant 0 : i32
    %c0_i32_1 = arith.constant 0 : i32
    return %arg0, %1, %c0_i32, %c0_i32_0 : i32, i32, i32, i32
  }
  func.func @transform_2(%arg0: i32, %arg1: i32, %arg2: i32) -> (i32, i32) {
    %c0_i32 = arith.constant 0 : i32
    %c0_i32_0 = arith.constant 0 : i32
    %c0_i32_1 = arith.constant 0 : i32
    return %c0_i32, %c0_i32_0 : i32, i32
  }
  func.func @transform_3(%arg0: i32, %arg1: i32, %arg2: i32) -> (i32, i32) {
    %c0_i32 = arith.constant 0 : i32
    %c0_i32_0 = arith.constant 0 : i32
    %c0_i32_1 = arith.constant 0 : i32
    return %c0_i32, %c0_i32_0 : i32, i32
  }
  func.func @transform_4(%arg0: i32, %arg1: i32, %arg2: i32) -> (i32, i32) {
    %c0_i32 = arith.constant 0 : i32
    %c0_i32_0 = arith.constant 0 : i32
    %c0_i32_1 = arith.constant 0 : i32
    return %c0_i32, %c0_i32_0 : i32, i32
  }
  func.func @transform_5(%arg0: i32, %arg1: i32, %arg2: i32) -> (i32, i32, i32) {
    %c1_i32 = arith.constant 1 : i32
    %0 = arith.muli %arg1, %c1_i32 : i32
    %1 = arith.addi %0, %arg2 : i32
    %c0_i32 = arith.constant 0 : i32
    %c0_i32_0 = arith.constant 0 : i32
    return %arg0, %c0_i32, %1 : i32, i32, i32
  }
  func.func @transform_6(%arg0: i32, %arg1: i32, %arg2: i32) -> (i32, i32, i32, i32) {
    %c0_i32 = arith.constant 0 : i32
    %c0_i32_0 = arith.constant 0 : i32
    %c0_i32_1 = arith.constant 0 : i32
    return %arg0, %arg1, %c0_i32, %c0_i32_0 : i32, i32, i32, i32
  }
}

</mosaic_0001>

<llo_original>
// kernel: tcn_block_forward.5
$region0: #{tcn_block_forward.5}
  #allocation0 [shape = 'u32[]', space=smem, size = 0x4, offset = 0x4, fixed_abs, tag = 'smem constant byte address 0x4 - core index']
  #allocation1 [shape = 'u32[144,128]{1,0:T(1,128)}', space=vmem, size = 0x12000, scoped, tag = 'internal scratch']
  %s0 = inlined_call_operand.vmem [shape: f32[2,8,12], index: 0, kind: input, shape index: {}]
  %s1 = inlined_call_operand.vmem [shape: f32[8,1], index: 1, kind: input, shape index: {}]
  %s2 = inlined_call_operand.vmem [shape: f32[8,1], index: 2, kind: input, shape index: {}]
  %s3 = inlined_call_operand.hbm [shape: f32[2,8,12], index: 3, kind: output, shape index: {}]
  %s4 = sld [smem:[#allocation0]]
  $region45: #{tcn_block_forward.5} parent=0
    _
  %s6 = ssub.s32 1, %s4
  %s7 = scalar_select 0, %s6, %s4
  $region1: #{tcn_block_forward.5} parent=0
    #allocation2 [shape = 'u8[8192]{0}', space=vmem, size = 0x2000, scoped, tag = 'output window, operand 0']
    #allocation3 [shape = 's32[2]{0}', space=sflag, size = 0x8, scoped, tag = 'scoped memory for tcn_block_forward.5']
    %8 = vsyncpa [#allocation3], 0
    %s9 = scalar_lea.sflag [#allocation3], 1
    %10 = vsyncpa %s9, 0
    loop: start=0, step=1, limit=4
    $region2: #{tcn_block_forward.5} parent=1 // loop_pre_header
      _
    $region3: #{tcn_block_forward.5} parent=1 // loop_header
      %s12 = sphi 0, %s16
      %p13 = scmp.ge.s32.totalorder %s12, 4
      %s19 = sphi 0, %s31
      %s20 = sphi 0, %s27
      %s21 = sphi 0, %s19
      %s22 = sphi 0, %s20
      %s23 = sphi 0, %s21
      %s24 = sphi 0, %s22
      %s36 = sphi 0, %s38
      %s39 = sphi 0, %s36
      %s40 = sphi 0, %s39
      %s56 = sphi 0, %s40
      %s60 = sphi 0, %s60
      %s62 = sphi 0, %s60
      %s63 = sphi 0, %s62
      %s77 = sphi 0, %s63
      %s81 = sphi 0, %s81
      %s83 = sphi 0, %s81
      %s84 = sphi 0, %s83
      %s98 = sphi 0, %s84
      %s106 = sphi 0, %s108
      %s109 = sphi 0, %s106
      %s110 = sphi 0, %s109
      %s126 = sphi 0, %s110
    $region4: #{tcn_block_forward.5} parent=1 // loop_header_branch
      %15 = sbr.rel (%p13) target = $region8
    $region5: #{tcn_block_forward.5} parent=1 // loop_body
      %s17 = ssub.s32 %s12, 1
      %s18 = ssub.s32 %s12, 2
      %s25 = sadd.s32 1, %s20
      %p26 = scmp.ge.s32.totalorder %s25, 1
      %s27 = scalar_select %p26, 0, %s25
      %s28 = sadd.s32 1, %s19
      %s29 = scalar_select %p26, %s28, %s19
      %p30 = scmp.ge.s32.totalorder %s29, 2
      %s31 = scalar_select %p30, 0, %s29
      %s32 = ssub.s32 %s19, %s31
      %s33 = ssub.s32 %s20, %s27
      %s34 = sor.u32 %s32, %s33
      %p35 = scmp.eq.s32.totalorder %s34, 0
      %s37 = sadd.s32 %s36, 1
      %s38 = scalar_select %p35, %s36, %s37
      %p41 = pneg %p35
      %p42 = scmp.eq.s32.totalorder %s12, 1
      %p43 = por %p41, %p42
      %p44 = scmp.ne.s32.totalorder %s36, %s39
      %p45 = scmp.eq.s32.totalorder %s12, 0
      %p46 = por %p44, %p45
      %p47 = scmp.ne.s32.totalorder %s36, %s39
      %p48 = scmp.eq.s32.totalorder %s17, 1
      %p49 = por %p47, %p48
      %p50 = scmp.ne.s32.totalorder %s39, %s40
      %p51 = scmp.eq.s32.totalorder %s17, 0
      %p52 = por %p50, %p51
      %p53 = scmp.ne.s32.totalorder %s39, %s40
      %p54 = scmp.eq.s32.totalorder %s18, 1
      %p55 = por %p53, %p54
      %p57 = scmp.ne.s32.totalorder %s40, %s56
      %p58 = scmp.eq.s32.totalorder %s18, 0
      %p59 = por %p57, %p58
      %s61 = sadd.s32 %s60, 1
      %p64 = scmp.eq.s32.totalorder %s12, 1
      %p65 = scmp.ne.s32.totalorder %s60, %s62
      %p66 = scmp.eq.s32.totalorder %s12, 0
      %p67 = por %p65, %p66
      %p68 = scmp.ne.s32.totalorder %s60, %s62
      %p69 = scmp.eq.s32.totalorder %s17, 1
      %p70 = por %p68, %p69
      %p71 = scmp.ne.s32.totalorder %s62, %s63
      %p72 = scmp.eq.s32.totalorder %s17, 0
      %p73 = por %p71, %p72
      %p74 = scmp.ne.s32.totalorder %s62, %s63
      %p75 = scmp.eq.s32.totalorder %s18, 1
      %p76 = por %p74, %p75
      %p78 = scmp.ne.s32.totalorder %s63, %s77
      %p79 = scmp.eq.s32.totalorder %s18, 0
      %p80 = por %p78, %p79
      %s82 = sadd.s32 %s81, 1
      %p85 = scmp.eq.s32.totalorder %s12, 1
      %p86 = scmp.ne.s32.totalorder %s81, %s83
      %p87 = scmp.eq.s32.totalorder %s12, 0
      %p88 = por %p86, %p87
      %p89 = scmp.ne.s32.totalorder %s81, %s83
      %p90 = scmp.eq.s32.totalorder %s17, 1
      %p91 = por %p89, %p90
      %p92 = scmp.ne.s32.totalorder %s83, %s84
      %p93 = scmp.eq.s32.totalorder %s17, 0
      %p94 = por %p92, %p93
      %p95 = scmp.ne.s32.totalorder %s83, %s84
      %p96 = scmp.eq.s32.totalorder %s18, 1
      %p97 = por %p95, %p96
      %p99 = scmp.ne.s32.totalorder %s84, %s98
      %p100 = scmp.eq.s32.totalorder %s18, 0
      %p101 = por %p99, %p100
      %s102 = ssub.s32 %s19, %s31
      %s103 = ssub.s32 %s20, %s27
      %s104 = sor.u32 %s102, %s103
      %p105 = scmp.eq.s32.totalorder %s104, 0
      %s107 = sadd.s32 %s106, 1
      %s108 = scalar_select %p105, %s106, %s107
      %p111 = pneg %p105
      %p112 = scmp.eq.s32.totalorder %s12, 1
      %p113 = por %p111, %p112
      %p114 = scmp.ne.s32.totalorder %s106, %s109
      %p115 = scmp.eq.s32.totalorder %s12, 0
      %p116 = por %p114, %p115
      %p117 = scmp.ne.s32.totalorder %s106, %s109
      %p118 = scmp.eq.s32.totalorder %s17, 1
      %p119 = por %p117, %p118
      %p120 = scmp.ne.s32.totalorder %s109, %s110
      %p121 = scmp.eq.s32.totalorder %s17, 0
      %p122 = por %p120, %p121
      %p123 = scmp.ne.s32.totalorder %s109, %s110
      %p124 = scmp.eq.s32.totalorder %s18, 1
      %p125 = por %p123, %p124
      %p127 = scmp.ne.s32.totalorder %s110, %s126
      %p128 = scmp.eq.s32.totalorder %s18, 0
      %p129 = por %p127, %p128
      %p130 = scmp.le.s32.totalorder 1, %s12
      %p131 = scmp.lt.s32.totalorder %s12, 3
      %p132 = pnand %p130, %p131
      %p133 = pneg %p132
      // Predicated region
      $region9: #{tcn_block_forward.5} parent=5 // pred_check
        _
      $region10: #{tcn_block_forward.5} parent=5 // pred_check_branch
        %135 = sbr.rel (%p132) target = $region12
      $region11: #{tcn_block_forward.5} parent=5 // pred_region
        %s136 = ssub.s32 %s12, 1
        // Predicated region
        $region13: #{tcn_block_forward.5} parent=11 // pred_check
          %p137 = pneg %p73
        $region14: #{tcn_block_forward.5} parent=11 // pred_check_branch
          %139 = sbr.rel (%p137) target = $region16
        $region15: #{tcn_block_forward.5} parent=11 // pred_region
          _
        $region16: #{tcn_block_forward.5} parent=11 // pred_fallthru
          _
        // Predicated region
        $region17: #{tcn_block_forward.5} parent=11 // pred_check
          %p140 = pneg %p94
        $region18: #{tcn_block_forward.5} parent=11 // pred_check_branch
          %142 = sbr.rel (%p140) target = $region20
        $region19: #{tcn_block_forward.5} parent=11 // pred_region
          _
        $region20: #{tcn_block_forward.5} parent=11 // pred_fallthru
          _
      $region12: #{tcn_block_forward.5} parent=5 // pred_fallthru
        _
      %p143 = scmp.lt.s32.totalorder %s12, 2
      // Predicated region
      $region21: #{tcn_block_forward.5} parent=5 // pred_check
        %p144 = pneg %p143
      $region22: #{tcn_block_forward.5} parent=5 // pred_check_branch
        %146 = sbr.rel (%p144) target = $region24
      $region23: #{tcn_block_forward.5} parent=5 // pred_region
        // Predicated region
        $region25: #{tcn_block_forward.5} parent=23 // pred_check
          %p147 = pneg %p46
        $region26: #{tcn_block_forward.5} parent=23 // pred_check_branch
          %149 = sbr.rel (%p147) target = $region28
        $region27: #{tcn_block_forward.5} parent=23 // pred_region
          %p150 = scmp.lt.s32.totalorder %s19, 1
          %s151 = scalar_select %p150, %s19, 1
          %p152 = scmp.lt.s32.totalorder %s20, 0
          %s153 = scalar_select %p152, %s20, 0
          %s154 = sadd.s32 %s153, %s151
          %s155 = smul.addr %s154, 8
          %s156 = scalar_lea.vmem %s0, %s155
        $region28: #{tcn_block_forward.5} parent=23 // pred_fallthru
          _
      $region24: #{tcn_block_forward.5} parent=5 // pred_fallthru
        _
      %p157 = scmp.le.s32.totalorder 1, %s12
      %p158 = scmp.lt.s32.totalorder %s12, 3
      %p159 = pnand %p157, %p158
      %p160 = pneg %p159
      // Predicated region
      $region29: #{tcn_block_forward.5} parent=5 // pred_check
        _
      $region30: #{tcn_block_forward.5} parent=5 // pred_check_branch
        %162 = sbr.rel (%p159) target = $region32
      $region31: #{tcn_block_forward.5} parent=5 // pred_region
        %s163 = ssub.s32 %s12, 1
        %p164 = scmp.lt.s32.totalorder %s21, 1
        %s165 = scalar_select %p164, %s21, 1
        %p166 = scmp.lt.s32.totalorder %s22, 0
        %s167 = scalar_select %p166, %s22, 0
        %s168 = sadd.s32 %s167, %s165
        %s169 = smul.addr %s168, 8
        %s170 = scalar_lea.vmem %s0, %s169
        %p171 = pneg %p52
        %p172 = pneg %p49
        %p173 = pneg %p73
        %p174 = pneg %p70
        %p175 = pneg %p94
        %p176 = pneg %p91
        %p177 = pneg %p122
        %p178 = pneg %p119
        %s179 = sand.u32 %s109, 1
        %s180 = scalar_lea.sflag [#allocation3], %s179
        %s181 = sand.u32 %s109, 1
        %s182 = smul.addr %s181, 8
        %s183 = scalar_lea.vmem [#allocation2], %s182
        %p184 = scmp.lt.s32.totalorder %s21, 1
        %s185 = scalar_select %p184, %s21, 1
        %p186 = scmp.lt.s32.totalorder %s22, 0
        %s187 = scalar_select %p186, %s22, 0
        %s188 = sadd.s32 %s187, %s185
        %s189 = smul.addr %s188, 8
        %s190 = scalar_lea.vmem %s0, %s189
        %v191 = vld [vmem:[%s190] sm:$0xff]
        %v192 = vld [vmem:[%s1] sm:$0xff]
        %194 = vset.pattern.permute.xlu0 0
        %195 = vperm.xlu0 %194, %v192
        %v196 = vpop.permute.xlu0 %195
        %v198 = vmul.f32 %v191, %v196
        %v199 = vld [vmem:[%s2] sm:$0xff]
        %201 = vset.pattern.permute.xlu0 0
        %202 = vperm.xlu0 %201, %v199
        %v203 = vpop.permute.xlu0 %202
        %v205 = vadd.f32 %v198, %v203
        %vm206 = vcmp.ge.f32.partialorder %v205, 0.0
        %v207 = vmul.f32 %v205, 0.01
        %v208 = vsel %vm206, %v205, %v207
        %vm209 = vcmask 97280
        %210 = vst.msk [vmem:[%s183] sm:$0xff] %vm209, %v208
        %s211 = sand.u32 %s109, 1
        %s212 = scalar_lea.sflag [#allocation3], %s211
        %s213 = sand.u32 %s109, 1
        %s214 = smul.addr %s213, 8
        %s215 = scalar_lea.vmem [#allocation2], %s214
        // Predicated region
        $region33: #{tcn_block_forward.5} parent=31 // pred_check
          %p216 = pneg %p119
        $region34: #{tcn_block_forward.5} parent=31 // pred_check_branch
          %218 = sbr.rel (%p216) target = $region36
        $region35: #{tcn_block_forward.5} parent=31 // pred_region
          %s220 = ssub.s32 128, 128
          %221 = vsyncadd %s212, %s220
          %s222 = sadd.s32 %s22, %s21
          %s223 = smul.addr %s222, 128
          %s224 = scalar_lea.hbm %s3, %s223
          %s226 = sshll.u32 %s215, 4
          %s227 = int_to_ptr.vmem [resolvable:$true] %s226
          %229 = dma.vmem_to_hbm [thread:$0]  %s227, 128, %s224, %s212
        $region36: #{tcn_block_forward.5} parent=31 // pred_fallthru
          _
      $region32: #{tcn_block_forward.5} parent=5 // pred_fallthru
        _
      %p230 = scmp.le.s32.totalorder 2, %s12
      // Predicated region
      $region37: #{tcn_block_forward.5} parent=5 // pred_check
        %p231 = pneg %p230
      $region38: #{tcn_block_forward.5} parent=5 // pred_check_branch
        %233 = sbr.rel (%p231) target = $region40
      $region39: #{tcn_block_forward.5} parent=5 // pred_region
        %s234 = ssub.s32 %s12, 2
        // Predicated region
        $region41: #{tcn_block_forward.5} parent=39 // pred_check
          %p235 = pneg %p125
        $region42: #{tcn_block_forward.5} parent=39 // pred_check_branch
          %237 = sbr.rel (%p235) target = $region44
        $region43: #{tcn_block_forward.5} parent=39 // pred_region
          %s238 = sand.u32 %s110, 1
          %s239 = scalar_lea.sflag [#allocation3], %s238
          %s240 = sand.u32 %s110, 1
          %s241 = smul.addr %s240, 8
          %s242 = scalar_lea.vmem [#allocation2], %s241
          %243 = dma.done %s239, 128
        $region44: #{tcn_block_forward.5} parent=39 // pred_fallthru
          _
      $region40: #{tcn_block_forward.5} parent=5 // pred_fallthru
        _
    $region6: #{tcn_block_forward.5} parent=1 // loop_footer
      %s16 = sadd.s32 1, %s12
    $region7: #{tcn_block_forward.5} parent=1 // loop_footer_branch
      %11 = sbr.rel target = $region3
    $region8: #{tcn_block_forward.5} parent=1 // loop_exit
      _
    %244 = vsyncpa [#allocation3], 1
    %s245 = scalar_lea.sflag [#allocation3], 1
    %246 = vsyncpa %s245, 1

// kernel: tcn_block_forward.3
$region0: #{tcn_block_forward.3}
  #allocation0 [shape = 'u32[]', space=smem, size = 0x4, offset = 0x4, fixed_abs, tag = 'smem constant byte address 0x4 - core index']
  #allocation1 [shape = 'u32[144,128]{1,0:T(1,128)}', space=vmem, size = 0x12000, scoped, tag = 'internal scratch']
  %s0 = inlined_call_operand.vmem [shape: f32[2,4,12], index: 0, kind: input, shape index: {}]
  %s1 = inlined_call_operand.vmem [shape: f32[2,1,4,4], index: 1, kind: input, shape index: {}]
  %s2 = inlined_call_operand.vmem [shape: f32[8,20], index: 2, kind: input, shape index: {}]
  %s3 = inlined_call_operand.vmem [shape: f32[2,8,12], index: 3, kind: output, shape index: {0}]
  %s4 = inlined_call_operand.vmem [shape: f32[2,1,8,2], index: 4, kind: output, shape index: {1}]
  %5 = xla_tuple %s3, %s4
  %s6 = sld [smem:[#allocation0]]
  $region65: #{tcn_block_forward.3} parent=0
    _
  %s8 = ssub.s32 1, %s6
  %s9 = scalar_select 0, %s8, %s6
  loop: start=0, step=1, limit=4
  $region2: #{tcn_block_forward.3} parent=0 // loop_pre_header
    _
  $region3: #{tcn_block_forward.3} parent=0 // loop_header
    %s11 = sphi 0, %s15
    %p12 = scmp.ge.s32.totalorder %s11, 4
    %s18 = sphi 0, %s37
    %s19 = sphi 0, %s33
    %s20 = sphi 0, %s29
    %s21 = sphi 0, %s18
    %s22 = sphi 0, %s19
    %s23 = sphi 0, %s20
    %s24 = sphi 0, %s21
    %s25 = sphi 0, %s22
    %s26 = sphi 0, %s23
    %s44 = sphi 0, %s46
    %s47 = sphi 0, %s44
    %s48 = sphi 0, %s47
    %s64 = sphi 0, %s48
    %s74 = sphi 0, %s76
    %s77 = sphi 0, %s74
    %s78 = sphi 0, %s77
    %s94 = sphi 0, %s78
    %s98 = sphi 0, %s98
    %s100 = sphi 0, %s98
    %s101 = sphi 0, %s100
    %s115 = sphi 0, %s101
    %s125 = sphi 0, %s127
    %s128 = sphi 0, %s125
    %s129 = sphi 0, %s128
    %s145 = sphi 0, %s129
    %s153 = sphi 0, %s155
    %s156 = sphi 0, %s153
    %s157 = sphi 0, %s156
    %s173 = sphi 0, %s157
  $region4: #{tcn_block_forward.3} parent=0 // loop_header_branch
    %14 = sbr.rel (%p12) target = $region8
  $region5: #{tcn_block_forward.3} parent=0 // loop_body
    %s16 = ssub.s32 %s11, 1
    %s17 = ssub.s32 %s11, 2
    %s27 = sadd.s32 1, %s20
    %p28 = scmp.ge.s32.totalorder %s27, 1
    %s29 = scalar_select %p28, 0, %s27
    %s30 = sadd.s32 1, %s19
    %s31 = scalar_select %p28, %s30, %s19
    %p32 = scmp.ge.s32.totalorder %s31, 1
    %s33 = scalar_select %p32, 0, %s31
    %s34 = sadd.s32 1, %s18
    %s35 = scalar_select %p32, %s34, %s18
    %p36 = scmp.ge.s32.totalorder %s35, 2
    %s37 = scalar_select %p36, 0, %s35
    %s38 = sadd.s32 %s19, %s20
    %s39 = sadd.s32 %s33, %s29
    %s40 = ssub.s32 %s18, %s37
    %s41 = ssub.s32 %s38, %s39
    %s42 = sor.u32 %s40, %s41
    %p43 = scmp.eq.s32.totalorder %s42, 0
    %s45 = sadd.s32 %s44, 1
    %s46 = scalar_select %p43, %s44, %s45
    %p49 = pneg %p43
    %p50 = scmp.eq.s32.totalorder %s11, 1
    %p51 = por %p49, %p50
    %p52 = scmp.ne.s32.totalorder %s44, %s47
    %p53 = scmp.eq.s32.totalorder %s11, 0
    %p54 = por %p52, %p53
    %p55 = scmp.ne.s32.totalorder %s44, %s47
    %p56 = scmp.eq.s32.totalorder %s16, 1
    %p57 = por %p55, %p56
    %p58 = scmp.ne.s32.totalorder %s47, %s48
    %p59 = scmp.eq.s32.totalorder %s16, 0
    %p60 = por %p58, %p59
    %p61 = scmp.ne.s32.totalorder %s47, %s48
    %p62 = scmp.eq.s32.totalorder %s17, 1
    %p63 = por %p61, %p62
    %p65 = scmp.ne.s32.totalorder %s48, %s64
    %p66 = scmp.eq.s32.totalorder %s17, 0
    %p67 = por %p65, %p66
    %s68 = sadd.s32 %s19, %s20
    %s69 = sadd.s32 %s33, %s29
    %s70 = ssub.s32 %s18, %s37
    %s71 = ssub.s32 %s68, %s69
    %s72 = sor.u32 %s70, %s71
    %p73 = scmp.eq.s32.totalorder %s72, 0
    %s75 = sadd.s32 %s74, 1
    %s76 = scalar_select %p73, %s74, %s75
    %p79 = pneg %p73
    %p80 = scmp.eq.s32.totalorder %s11, 1
    %p81 = por %p79, %p80
    %p82 = scmp.ne.s32.totalorder %s74, %s77
    %p83 = scmp.eq.s32.totalorder %s11, 0
    %p84 = por %p82, %p83
    %p85 = scmp.ne.s32.totalorder %s74, %s77
    %p86 = scmp.eq.s32.totalorder %s16, 1
    %p87 = por %p85, %p86
    %p88 = scmp.ne.s32.totalorder %s77, %s78
    %p89 = scmp.eq.s32.totalorder %s16, 0
    %p90 = por %p88, %p89
    %p91 = scmp.ne.s32.totalorder %s77, %s78
    %p92 = scmp.eq.s32.totalorder %s17, 1
    %p93 = por %p91, %p92
    %p95 = scmp.ne.s32.totalorder %s78, %s94
    %p96 = scmp.eq.s32.totalorder %s17, 0
    %p97 = por %p95, %p96
    %s99 = sadd.s32 %s98, 1
    %p102 = scmp.eq.s32.totalorder %s11, 1
    %p103 = scmp.ne.s32.totalorder %s98, %s100
    %p104 = scmp.eq.s32.totalorder %s11, 0
    %p105 = por %p103, %p104
    %p106 = scmp.ne.s32.totalorder %s98, %s100
    %p107 = scmp.eq.s32.totalorder %s16, 1
    %p108 = por %p106, %p107
    %p109 = scmp.ne.s32.totalorder %s100, %s101
    %p110 = scmp.eq.s32.totalorder %s16, 0
    %p111 = por %p109, %p110
    %p112 = scmp.ne.s32.totalorder %s100, %s101
    %p113 = scmp.eq.s32.totalorder %s17, 1
    %p114 = por %p112, %p113
    %p116 = scmp.ne.s32.totalorder %s101, %s115
    %p117 = scmp.eq.s32.totalorder %s17, 0
    %p118 = por %p116, %p117
    %s119 = sadd.s32 %s19, %s20
    %s120 = sadd.s32 %s33, %s29
    %s121 = ssub.s32 %s18, %s37
    %s122 = ssub.s32 %s119, %s120
    %s123 = sor.u32 %s121, %s122
    %p124 = scmp.eq.s32.totalorder %s123, 0
    %s126 = sadd.s32 %s125, 1
    %s127 = scalar_select %p124, %s125, %s126
    %p130 = pneg %p124
    %p131 = scmp.eq.s32.totalorder %s11, 1
    %p132 = por %p130, %p131
    %p133 = scmp.ne.s32.totalorder %s125, %s128
    %p134 = scmp.eq.s32.totalorder %s11, 0
    %p135 = por %p133, %p134
    %p136 = scmp.ne.s32.totalorder %s125, %s128
    %p137 = scmp.eq.s32.totalorder %s16, 1
    %p138 = por %p136, %p137
    %p139 = scmp.ne.s32.totalorder %s128, %s129
    %p140 = scmp.eq.s32.totalorder %s16, 0
    %p141 = por %p139, %p140
    %p142 = scmp.ne.s32.totalorder %s128, %s129
    %p143 = scmp.eq.s32.totalorder %s17, 1
    %p144 = por %p142, %p143
    %p146 = scmp.ne.s32.totalorder %s129, %s145
    %p147 = scmp.eq.s32.totalorder %s17, 0
    %p148 = por %p146, %p147
    %s149 = ssub.s32 %s18, %s37
    %s150 = ssub.s32 %s19, %s33
    %s151 = sor.u32 %s149, %s150
    %p152 = scmp.eq.s32.totalorder %s151, 0
    %s154 = sadd.s32 %s153, 1
    %s155 = scalar_select %p152, %s153, %s154
    %p158 = pneg %p152
    %p159 = scmp.eq.s32.totalorder %s11, 1
    %p160 = por %p158, %p159
    %p161 = scmp.ne.s32.totalorder %s153, %s156
    %p162 = scmp.eq.s32.totalorder %s11, 0
    %p163 = por %p161, %p162
    %p164 = scmp.ne.s32.totalorder %s153, %s156
    %p165 = scmp.eq.s32.totalorder %s16, 1
    %p166 = por %p164, %p165
    %p167 = scmp.ne.s32.totalorder %s156, %s157
    %p168 = scmp.eq.s32.totalorder %s16, 0
    %p169 = por %p167, %p168
    %p170 = scmp.ne.s32.totalorder %s156, %s157
    %p171 = scmp.eq.s32.totalorder %s17, 1
    %p172 = por %p170, %p171
    %p174 = scmp.ne.s32.totalorder %s157, %s173
    %p175 = scmp.eq.s32.totalorder %s17, 0
    %p176 = por %p174, %p175
    %p177 = scmp.le.s32.totalorder 1, %s11
    %p178 = scmp.lt.s32.totalorder %s11, 3
    %p179 = pnand %p177, %p178
    %p180 = pneg %p179
    // Predicated region
    $region9: #{tcn_block_forward.3} parent=5 // pred_check
      _
    $region10: #{tcn_block_forward.3} parent=5 // pred_check_branch
      %182 = sbr.rel (%p179) target = $region12
    $region11: #{tcn_block_forward.3} parent=5 // pred_region
      %s183 = ssub.s32 %s11, 1
      // Predicated region
      $region13: #{tcn_block_forward.3} parent=11 // pred_check
        %p184 = pneg %p111
      $region14: #{tcn_block_forward.3} parent=11 // pred_check_branch
        %186 = sbr.rel (%p184) target = $region16
      $region15: #{tcn_block_forward.3} parent=11 // pred_region
        _
      $region16: #{tcn_block_forward.3} parent=11 // pred_fallthru
        _
    $region12: #{tcn_block_forward.3} parent=5 // pred_fallthru
      _
    %p187 = scmp.lt.s32.totalorder %s11, 2
    // Predicated region
    $region17: #{tcn_block_forward.3} parent=5 // pred_check
      %p188 = pneg %p187
    $region18: #{tcn_block_forward.3} parent=5 // pred_check_branch
      %190 = sbr.rel (%p188) target = $region20
    $region19: #{tcn_block_forward.3} parent=5 // pred_region
      // Predicated region
      $region21: #{tcn_block_forward.3} parent=19 // pred_check
        %p191 = pneg %p54
      $region22: #{tcn_block_forward.3} parent=19 // pred_check_branch
        %193 = sbr.rel (%p191) target = $region24
      $region23: #{tcn_block_forward.3} parent=19 // pred_region
        %s194 = sadd.s32 %s19, %s20
        %p195 = scmp.lt.s32.totalorder %s18, 1
        %s196 = scalar_select %p195, %s18, 1
        %p197 = scmp.lt.s32.totalorder %s194, 0
        %s198 = scalar_select %p197, %s194, 0
        %s199 = sadd.s32 %s198, %s196
        %s200 = smul.addr %s199, 4
        %s201 = scalar_lea.vmem %s0, %s200
        %s202 = sadd.s32 %s19, %s20
      $region24: #{tcn_block_forward.3} parent=19 // pred_fallthru
        _
      // Predicated region
      $region25: #{tcn_block_forward.3} parent=19 // pred_check
        %p203 = pneg %p84
      $region26: #{tcn_block_forward.3} parent=19 // pred_check_branch
        %205 = sbr.rel (%p203) target = $region28
      $region27: #{tcn_block_forward.3} parent=19 // pred_region
        %s206 = sadd.s32 %s19, %s20
        %p207 = scmp.lt.s32.totalorder %s18, 1
        %s208 = scalar_select %p207, %s18, 1
        %p209 = scmp.lt.s32.totalorder %s206, 0
        %s210 = scalar_select %p209, %s206, 0
        %s211 = sadd.s32 %s210, %s208
        %s212 = smul.addr %s211, 4
        %s213 = scalar_lea.vmem %s1, %s212
        %s214 = sadd.s32 %s19, %s20
      $region28: #{tcn_block_forward.3} parent=19 // pred_fallthru
        _
    $region20: #{tcn_block_forward.3} parent=5 // pred_fallthru
      _
    %p215 = scmp.le.s32.totalorder 1, %s11
    %p216 = scmp.lt.s32.totalorder %s11, 3
    %p217 = pnand %p215, %p216
    %p218 = pneg %p217
    // Predicated region
    $region29: #{tcn_block_forward.3} parent=5 // pred_check
      _
    $region30: #{tcn_block_forward.3} parent=5 // pred_check_branch
      %220 = sbr.rel (%p217) target = $region32
    $region31: #{tcn_block_forward.3} parent=5 // pred_region
      %s221 = ssub.s32 %s11, 1
      %s222 = sadd.s32 %s22, %s23
      %p223 = scmp.lt.s32.totalorder %s21, 1
      %s224 = scalar_select %p223, %s21, 1
      %p225 = scmp.lt.s32.totalorder %s222, 0
      %s226 = scalar_select %p225, %s222, 0
      %s227 = sadd.s32 %s226, %s224
      %s228 = smul.addr %s227, 4
      %s229 = scalar_lea.vmem %s0, %s228
      %p230 = pneg %p60
      %p231 = pneg %p57
      %s232 = sadd.s32 %s22, %s23
      %p233 = scmp.lt.s32.totalorder %s21, 1
      %s234 = scalar_select %p233, %s21, 1
      %p235 = scmp.lt.s32.totalorder %s232, 0
      %s236 = scalar_select %p235, %s232, 0
      %s237 = sadd.s32 %s236, %s234
      %s238 = smul.addr %s237, 4
      %s239 = scalar_lea.vmem %s1, %s238
      %p240 = pneg %p90
      %p241 = pneg %p87
      %p242 = pneg %p111
      %p243 = pneg %p108
      %p244 = pneg %p141
      %p245 = pneg %p138
      %s246 = sadd.s32 %s22, %s23
      %p247 = scmp.lt.s32.totalorder %s21, 1
      %s248 = scalar_select %p247, %s21, 1
      %p249 = scmp.lt.s32.totalorder %s246, 0
      %s250 = scalar_select %p249, %s246, 0
      %s251 = sadd.s32 %s250, %s248
      %s252 = smul.addr %s251, 8
      %s253 = scalar_lea.vmem %s3, %s252
      %p254 = pneg %p169
      %p255 = pneg %p166
      %p256 = scmp.lt.s32.totalorder %s21, 1
      %s257 = scalar_select %p256, %s21, 1
      %p258 = scmp.lt.s32.totalorder %s22, 0
      %s259 = scalar_select %p258, %s22, 0
      %s260 = sadd.s32 %s259, %s257
      %s261 = smul.addr %s260, 8
      %s262 = scalar_lea.vmem %s4, %s261
      %s263 = sadd.s32 %s22, %s23
      %p264 = scmp.lt.s32.totalorder %s21, 1
      %s265 = scalar_select %p264, %s21, 1
      %p266 = scmp.lt.s32.totalorder %s263, 0
      %s267 = scalar_select %p266, %s263, 0
      %s268 = sadd.s32 %s267, %s265
      %s269 = smul.addr %s268, 4
      %s270 = scalar_lea.vmem %s0, %s269
      %s271 = sadd.s32 %s22, %s23
      %s272 = sadd.s32 %s22, %s23
      %p273 = scmp.lt.s32.totalorder %s21, 1
      %s274 = scalar_select %p273, %s21, 1
      %p275 = scmp.lt.s32.totalorder %s272, 0
      %s276 = scalar_select %p275, %s272, 0
      %s277 = sadd.s32 %s276, %s274
      %s278 = smul.addr %s277, 4
      %s279 = scalar_lea.vmem %s1, %s278
      %s280 = sadd.s32 %s22, %s23
      %s281 = sadd.s32 %s22, %s23
      %p282 = scmp.lt.s32.totalorder %s21, 1
      %s283 = scalar_select %p282, %s21, 1
      %p284 = scmp.lt.s32.totalorder %s281, 0
      %s285 = scalar_select %p284, %s281, 0
      %s286 = sadd.s32 %s285, %s283
      %s287 = smul.addr %s286, 8
      %s288 = scalar_lea.vmem %s3, %s287
      %s289 = sadd.s32 %s22, %s23
      %p290 = scmp.lt.s32.totalorder %s21, 1
      %s291 = scalar_select %p290, %s21, 1
      %p292 = scmp.lt.s32.totalorder %s22, 0
      %s293 = scalar_select %p292, %s22, 0
      %s294 = sadd.s32 %s293, %s291
      %s295 = smul.addr %s294, 8
      %s296 = scalar_lea.vmem %s4, %s295
      %v297 = vld [vmem:[%s270] sm:$0xf]
      %v298 = vld [vmem:[%s279] sm:$0xf]
      %300 = vrot.lane.b32.xlu0 %v298, 12
      %v301 = vpop.permute.xlu0 %300
      %vm303 = vcmask 97280
      %v304 = vsel %vm303, %v297, %v301
      %s305 = sadd.s32 %s22, %s23
      %v307 = vrot.slane %v304, 4
      %308 = vrot.lane.b32.xlu0 %v307, 127
      %v309 = vpop.permute.xlu0 %308
      %311 = vrot.lane.b32.xlu0 %v304, 126
      %v312 = vpop.permute.xlu0 %311
      %314 = vrot.lane.b32.xlu0 %v307, 125
      %v315 = vpop.permute.xlu0 %314
      %317 = vrot.lane.b32.xlu0 %v304, 124
      %v318 = vpop.permute.xlu0 %317
      %vm319 = vcmask 1043456
      %v320 = vsel %vm319, %v304, %v309
      %v321 = vsel %vm319, %v312, %v315
      %v322 = vld [vmem:[%s2] sm:$0xff]
      %vm323 = vcmask 162816
      %v325 = vsel %vm323, %v322, 0
      %v327 = vsel %vm319, %v318, 0
      %329 = vmatprep.subr.mxu0 0.0
      %330 = vmatpush1.msra.mxu0 %v320
      %331 = vmatprep.subr.mxu0 0.0
      %332 = vmatpush1.msra.mxu0 %v321
      %333 = vmatprep.subr.mxu0 0.0
      %334 = vmatpush1.msra.mxu0 %v327
      %335 = vmatprep.subr.mxu0 0.0
      %336 = vmatpush1.msra.mxu0 0.0
      %337 = vmatprep.subr.mxu0 0.0
      %338 = vmatpush1.msra.mxu0 0.0
      %339 = vmatprep.subr.mxu0 0.0
      %340 = vmatpush1.msra.mxu0 0.0
      %341 = vmatprep.subr.mxu0 0.0
      %342 = vmatpush1.msra.mxu0 0.0
      %343 = vmatprep.subr.mxu0 0.0
      %344 = vmatpush1.msra.mxu0 0.0
      %345 = vmatprep.subr.mxu0 0.0
      %346 = vmatpush1.msra.mxu0 0.0
      %347 = vmatprep.subr.mxu0 0.0
      %348 = vmatpush1.msra.mxu0 0.0
      %349 = vmatprep.subr.mxu0 0.0
      %350 = vmatpush1.msra.mxu0 0.0
      %351 = vmatprep.subr.mxu0 0.0
      %352 = vmatpush1.msra.mxu0 0.0
      %353 = vmatprep.subr.mxu0 0.0
      %354 = vmatpush1.msra.mxu0 0.0
      %355 = vmatprep.subr.mxu0 0.0
      %356 = vmatpush1.msra.mxu0 0.0
      %357 = vmatprep.subr.mxu0 0.0
      %358 = vmatpush1.msra.mxu0 0.0
      %359 = vmatprep.subr.mxu0 0.0
      %360 = vmatpush1.msra.mxu0 0.0
      %361 = vmatprep.subr.mxu0 0.0
      %362 = vmatpush1.msra.mxu0 0.0
      %363 = vmatprep.subr.mxu0 0.0
      %364 = vmatpush1.msra.mxu0 0.0
      %365 = vmatprep.subr.mxu0 0.0
      %366 = vmatpush1.msra.mxu0 0.0
      %367 = vmatprep.subr.mxu0 0.0
      %368 = vmatpush1.msra.mxu0 0.0
      %369 = vmatprep.subr.mxu0 0.0
      %370 = vmatpush1.msra.mxu0 0.0
      %371 = vmatprep.subr.mxu0 0.0
      %372 = vmatpush1.msra.mxu0 0.0
      %373 = vmatprep.subr.mxu0 0.0
      %374 = vmatpush1.msra.mxu0 0.0
      %375 = vmatprep.subr.mxu0 0.0
      %376 = vmatpush1.msra.mxu0 0.0
      %377 = vmatprep.subr.mxu0 0.0
      %378 = vmatpush1.msra.mxu0 0.0
      %379 = vmatprep.subr.mxu0 0.0
      %380 = vmatpush1.msra.mxu0 0.0
      %381 = vmatprep.subr.mxu0 0.0
      %382 = vmatpush1.msra.mxu0 0.0
      %383 = vmatprep.subr.mxu0 0.0
      %384 = vmatpush1.msra.mxu0 0.0
      %385 = vmatprep.subr.mxu0 0.0
      %386 = vmatpush1.msra.mxu0 0.0
      %387 = vmatprep.subr.mxu0 0.0
      %388 = vmatpush1.msra.mxu0 0.0
      %389 = vmatprep.subr.mxu0 0.0
      %390 = vmatpush1.msra.mxu0 0.0
      %391 = vmatprep.subr.mxu0 0.0
      %392 = vmatpush1.msra.mxu0 0.0
      %393 = vmatprep.mubr.f32.mxu0 0.0
      %394 = vmatmul.mubr.f32.gmra.mrb[0].mxu0 %v325
      %v395 = vpop.f32.mrb[0].mxu0
      %v396 = vadd.f32 0.0, %v395
      %v397 = vpop.f32.mrb[0].mxu0
      %398 = vdwg.mxu0
      %399 = vst.msk [vmem:[%s288] sm:$0xff] %vm303, %v396
      %p400 = scmp.eq.s32.totalorder %s23, 0
      // Predicated region
      $region33: #{tcn_block_forward.3} parent=31 // pred_check
        %p401 = pneg %p400
      $region34: #{tcn_block_forward.3} parent=31 // pred_check_branch
        %403 = sbr.rel (%p401) target = $region36
      $region35: #{tcn_block_forward.3} parent=31 // pred_region
        %vm404 = vcmask 15360
        %405 = vst.msk [vmem:[%s296] sm:$0xff] %vm404, 0.0
      $region36: #{tcn_block_forward.3} parent=31 // pred_fallthru
        _
      %s406 = sadd.s32 %s305, 1
      %s407 = smul.u32 %s406, 12
      %p408 = scmp.le.s32.totalorder %s407, 12
      // Predicated region
      $region37: #{tcn_block_forward.3} parent=31 // pred_check
        %p409 = pneg %p408
      $region38: #{tcn_block_forward.3} parent=31 // pred_check_branch
        %411 = sbr.rel (%p409) target = $region40
      $region39: #{tcn_block_forward.3} parent=31 // pred_region
        %v412 = vsel %vm303, %v396, 0.0
        %413 = vadd.xlane.f32.xlu0 %v412
        %v414 = vpop.xlane.xlu0 %413
        %v415 = vmul.f32 %v396, %v396
        %v416 = vsel %vm303, %v415, 0.0
        %417 = vadd.xlane.f32.xlu0 %v416
        %v418 = vpop.xlane.xlu0 %417
        %vm419 = vcmask 7168
        %v420 = vsel %vm419, %v414, %v418
        %v421 = vld [vmem:[%s296] sm:$0xff]
        %v422 = vadd.f32 %v421, %v420
        %vm423 = vcmask 15360
        %424 = vst.msk [vmem:[%s296] sm:$0xff] %vm423, %v422
      $region40: #{tcn_block_forward.3} parent=31 // pred_fallthru
        _
      %p425 = scmp.gt.s32.totalorder %s407, 12
      // Predicated region
      $region41: #{tcn_block_forward.3} parent=31 // pred_check
        %p426 = pneg %p425
      $region42: #{tcn_block_forward.3} parent=31 // pred_check_branch
        %428 = sbr.rel (%p426) target = $region44
      $region43: #{tcn_block_forward.3} parent=31 // pred_region
        %v429 = vlaneseq
        %v430 = vand.u32 %v429, 127
        %s431 = smul.u32 %s305, 12
        %v432 = vstv %s431
        %v433 = vadd.s32 %v432, %v430
        %vm434 = vcmp.lt.s32.totalorder %v433, 12
        %v435 = vsel %vm434, %v396, 0.0
        %v436 = vsel %vm303, %v435, 0.0
        %437 = vadd.xlane.f32.xlu0 %v436
        %v438 = vpop.xlane.xlu0 %437
        %v439 = vmul.f32 %v435, %v435
        %v440 = vsel %vm303, %v439, 0.0
        %441 = vadd.xlane.f32.xlu0 %v440
        %v442 = vpop.xlane.xlu0 %441
        %vm443 = vcmask 7168
        %v444 = vsel %vm443, %v438, %v442
        %v445 = vld [vmem:[%s296] sm:$0xff]
        %v446 = vadd.f32 %v445, %v444
        %vm447 = vcmask 15360
        %448 = vst.msk [vmem:[%s296] sm:$0xff] %vm447, %v446
      $region44: #{tcn_block_forward.3} parent=31 // pred_fallthru
        _
      %s449 = sadd.s32 %s22, %s23
      %p450 = scmp.lt.s32.totalorder %s21, 1
      %s451 = scalar_select %p450, %s21, 1
      %p452 = scmp.lt.s32.totalorder %s449, 0
      %s453 = scalar_select %p452, %s449, 0
      %s454 = sadd.s32 %s453, %s451
      %s455 = smul.addr %s454, 8
      %s456 = scalar_lea.vmem %s3, %s455
      %p457 = scmp.lt.s32.totalorder %s21, 1
      %s458 = scalar_select %p457, %s21, 1
      %p459 = scmp.lt.s32.totalorder %s22, 0
      %s460 = scalar_select %p459, %s22, 0
      %s461 = sadd.s32 %s460, %s458
      %s462 = smul.addr %s461, 8
      %s463 = scalar_lea.vmem %s4, %s462
      // Predicated region
      $region45: #{tcn_block_forward.3} parent=31 // pred_check
        %p464 = pneg %p138
      $region46: #{tcn_block_forward.3} parent=31 // pred_check_branch
        %466 = sbr.rel (%p464) target = $region48
      $region47: #{tcn_block_forward.3} parent=31 // pred_region
        %s467 = sadd.s32 %s22, %s23
      $region48: #{tcn_block_forward.3} parent=31 // pred_fallthru
        _
      // Predicated region
      $region49: #{tcn_block_forward.3} parent=31 // pred_check
        %p468 = pneg %p166
      $region50: #{tcn_block_forward.3} parent=31 // pred_check_branch
        %470 = sbr.rel (%p468) target = $region52
      $region51: #{tcn_block_forward.3} parent=31 // pred_region
        _
      $region52: #{tcn_block_forward.3} parent=31 // pred_fallthru
        _
    $region32: #{tcn_block_forward.3} parent=5 // pred_fallthru
      _
    %p471 = scmp.le.s32.totalorder 2, %s11
    // Predicated region
    $region53: #{tcn_block_forward.3} parent=5 // pred_check
      %p472 = pneg %p471
    $region54: #{tcn_block_forward.3} parent=5 // pred_check_branch
      %474 = sbr.rel (%p472) target = $region56
    $region55: #{tcn_block_forward.3} parent=5 // pred_region
      %s475 = ssub.s32 %s11, 2
      // Predicated region
      $region57: #{tcn_block_forward.3} parent=55 // pred_check
        %p476 = pneg %p144
      $region58: #{tcn_block_forward.3} parent=55 // pred_check_branch
        %478 = sbr.rel (%p476) target = $region60
      $region59: #{tcn_block_forward.3} parent=55 // pred_region
        %s479 = sadd.s32 %s25, %s26
        %p480 = scmp.lt.s32.totalorder %s24, 1
        %s481 = scalar_select %p480, %s24, 1
        %p482 = scmp.lt.s32.totalorder %s479, 0
        %s483 = scalar_select %p482, %s479, 0
        %s484 = sadd.s32 %s483, %s481
        %s485 = smul.addr %s484, 8
        %s486 = scalar_lea.vmem %s3, %s485
      $region60: #{tcn_block_forward.3} parent=55 // pred_fallthru
        _
      // Predicated region
      $region61: #{tcn_block_forward.3} parent=55 // pred_check
        %p487 = pneg %p172
      $region62: #{tcn_block_forward.3} parent=55 // pred_check_branch
        %489 = sbr.rel (%p487) target = $region64
      $region63: #{tcn_block_forward.3} parent=55 // pred_region
        %p490 = scmp.lt.s32.totalorder %s24, 1
        %s491 = scalar_select %p490, %s24, 1
        %p492 = scmp.lt.s32.totalorder %s25, 0
        %s493 = scalar_select %p492, %s25, 0
        %s494 = sadd.s32 %s493, %s491
        %s495 = smul.addr %s494, 8
        %s496 = scalar_lea.vmem %s4, %s495
      $region64: #{tcn_block_forward.3} parent=55 // pred_fallthru
        _
    $region56: #{tcn_block_forward.3} parent=5 // pred_fallthru
      _
  $region6: #{tcn_block_forward.3} parent=0 // loop_footer
    %s15 = sadd.s32 1, %s11
  $region7: #{tcn_block_forward.3} parent=0 // loop_footer_branch
    %10 = sbr.rel target = $region3
  $region8: #{tcn_block_forward.3} parent=0 // loop_exit
    _

// kernel: tcn_block_forward.4
$region0: #{tcn_block_forward.4}
  #allocation0 [shape = 'u32[]', space=smem, size = 0x4, offset = 0x4, fixed_abs, tag = 'smem constant byte address 0x4 - core index']
  #allocation1 [shape = 'u32[144,128]{1,0:T(1,128)}', space=vmem, size = 0x12000, scoped, tag = 'internal scratch']
  %s0 = inlined_call_operand.vmem [shape: f32[2,8,12], index: 0, kind: input, shape index: {}]
  %s1 = inlined_call_operand.vmem [shape: f32[2,1,8,4], index: 1, kind: input, shape index: {}]
  %s2 = inlined_call_operand.vmem [shape: f32[8,1], index: 2, kind: input, shape index: {}]
  %s3 = inlined_call_operand.vmem [shape: f32[8,1], index: 3, kind: input, shape index: {}]
  %s4 = inlined_call_operand.vmem [shape: f32[8,40], index: 4, kind: input, shape index: {}]
  %s5 = inlined_call_operand.vmem [shape: f32[2,8,12], index: 5, kind: output, shape index: {0}]
  %s6 = inlined_call_operand.vmem [shape: f32[2,1,8,2], index: 6, kind: output, shape index: {1}]
  %7 = xla_tuple %s5, %s6
  %s8 = sld [smem:[#allocation0]]
  $region73: #{tcn_block_forward.4} parent=0
    _
  %s10 = ssub.s32 1, %s8
  %s11 = scalar_select 0, %s10, %s8
  loop: start=0, step=1, limit=4
  $region2: #{tcn_block_forward.4} parent=0 // loop_pre_header
    _
  $region3: #{tcn_block_forward.4} parent=0 // loop_header
    %s13 = sphi 0, %s17
    %p14 = scmp.ge.s32.totalorder %s13, 4
    %s20 = sphi 0, %s39
    %s21 = sphi 0, %s35
    %s22 = sphi 0, %s31
    %s23 = sphi 0, %s20
    %s24 = sphi 0, %s21
    %s25 = sphi 0, %s22
    %s26 = sphi 0, %s23
    %s27 = sphi 0, %s24
    %s28 = sphi 0, %s25
    %s46 = sphi 0, %s48
    %s49 = sphi 0, %s46
    %s50 = sphi 0, %s49
    %s66 = sphi 0, %s50
    %s76 = sphi 0, %s78
    %s79 = sphi 0, %s76
    %s80 = sphi 0, %s79
    %s96 = sphi 0, %s80
    %s100 = sphi 0, %s100
    %s102 = sphi 0, %s100
    %s103 = sphi 0, %s102
    %s117 = sphi 0, %s103
    %s121 = sphi 0, %s121
    %s123 = sphi 0, %s121
    %s124 = sphi 0, %s123
    %s138 = sphi 0, %s124
    %s142 = sphi 0, %s142
    %s144 = sphi 0, %s142
    %s145 = sphi 0, %s144
    %s159 = sphi 0, %s145
    %s169 = sphi 0, %s171
    %s172 = sphi 0, %s169
    %s173 = sphi 0, %s172
    %s189 = sphi 0, %s173
    %s197 = sphi 0, %s199
    %s200 = sphi 0, %s197
    %s201 = sphi 0, %s200
    %s217 = sphi 0, %s201
  $region4: #{tcn_block_forward.4} parent=0 // loop_header_branch
    %16 = sbr.rel (%p14) target = $region8
  $region5: #{tcn_block_forward.4} parent=0 // loop_body
    %s18 = ssub.s32 %s13, 1
    %s19 = ssub.s32 %s13, 2
    %s29 = sadd.s32 1, %s22
    %p30 = scmp.ge.s32.totalorder %s29, 1
    %s31 = scalar_select %p30, 0, %s29
    %s32 = sadd.s32 1, %s21
    %s33 = scalar_select %p30, %s32, %s21
    %p34 = scmp.ge.s32.totalorder %s33, 1
    %s35 = scalar_select %p34, 0, %s33
    %s36 = sadd.s32 1, %s20
    %s37 = scalar_select %p34, %s36, %s20
    %p38 = scmp.ge.s32.totalorder %s37, 2
    %s39 = scalar_select %p38, 0, %s37
    %s40 = sadd.s32 %s21, %s22
    %s41 = sadd.s32 %s35, %s31
    %s42 = ssub.s32 %s20, %s39
    %s43 = ssub.s32 %s40, %s41
    %s44 = sor.u32 %s42, %s43
    %p45 = scmp.eq.s32.totalorder %s44, 0
    %s47 = sadd.s32 %s46, 1
    %s48 = scalar_select %p45, %s46, %s47
    %p51 = pneg %p45
    %p52 = scmp.eq.s32.totalorder %s13, 1
    %p53 = por %p51, %p52
    %p54 = scmp.ne.s32.totalorder %s46, %s49
    %p55 = scmp.eq.s32.totalorder %s13, 0
    %p56 = por %p54, %p55
    %p57 = scmp.ne.s32.totalorder %s46, %s49
    %p58 = scmp.eq.s32.totalorder %s18, 1
    %p59 = por %p57, %p58
    %p60 = scmp.ne.s32.totalorder %s49, %s50
    %p61 = scmp.eq.s32.totalorder %s18, 0
    %p62 = por %p60, %p61
    %p63 = scmp.ne.s32.totalorder %s49, %s50
    %p64 = scmp.eq.s32.totalorder %s19, 1
    %p65 = por %p63, %p64
    %p67 = scmp.ne.s32.totalorder %s50, %s66
    %p68 = scmp.eq.s32.totalorder %s19, 0
    %p69 = por %p67, %p68
    %s70 = sadd.s32 %s21, %s22
    %s71 = sadd.s32 %s35, %s31
    %s72 = ssub.s32 %s20, %s39
    %s73 = ssub.s32 %s70, %s71
    %s74 = sor.u32 %s72, %s73
    %p75 = scmp.eq.s32.totalorder %s74, 0
    %s77 = sadd.s32 %s76, 1
    %s78 = scalar_select %p75, %s76, %s77
    %p81 = pneg %p75
    %p82 = scmp.eq.s32.totalorder %s13, 1
    %p83 = por %p81, %p82
    %p84 = scmp.ne.s32.totalorder %s76, %s79
    %p85 = scmp.eq.s32.totalorder %s13, 0
    %p86 = por %p84, %p85
    %p87 = scmp.ne.s32.totalorder %s76, %s79
    %p88 = scmp.eq.s32.totalorder %s18, 1
    %p89 = por %p87, %p88
    %p90 = scmp.ne.s32.totalorder %s79, %s80
    %p91 = scmp.eq.s32.totalorder %s18, 0
    %p92 = por %p90, %p91
    %p93 = scmp.ne.s32.totalorder %s79, %s80
    %p94 = scmp.eq.s32.totalorder %s19, 1
    %p95 = por %p93, %p94
    %p97 = scmp.ne.s32.totalorder %s80, %s96
    %p98 = scmp.eq.s32.totalorder %s19, 0
    %p99 = por %p97, %p98
    %s101 = sadd.s32 %s100, 1
    %p104 = scmp.eq.s32.totalorder %s13, 1
    %p105 = scmp.ne.s32.totalorder %s100, %s102
    %p106 = scmp.eq.s32.totalorder %s13, 0
    %p107 = por %p105, %p106
    %p108 = scmp.ne.s32.totalorder %s100, %s102
    %p109 = scmp.eq.s32.totalorder %s18, 1
    %p110 = por %p108, %p109
    %p111 = scmp.ne.s32.totalorder %s102, %s103
    %p112 = scmp.eq.s32.totalorder %s18, 0
    %p113 = por %p111, %p112
    %p114 = scmp.ne.s32.totalorder %s102, %s103
    %p115 = scmp.eq.s32.totalorder %s19, 1
    %p116 = por %p114, %p115
    %p118 = scmp.ne.s32.totalorder %s103, %s117
    %p119 = scmp.eq.s32.totalorder %s19, 0
    %p120 = por %p118, %p119
    %s122 = sadd.s32 %s121, 1
    %p125 = scmp.eq.s32.totalorder %s13, 1
    %p126 = scmp.ne.s32.totalorder %s121, %s123
    %p127 = scmp.eq.s32.totalorder %s13, 0
    %p128 = por %p126, %p127
    %p129 = scmp.ne.s32.totalorder %s121, %s123
    %p130 = scmp.eq.s32.totalorder %s18, 1
    %p131 = por %p129, %p130
    %p132 = scmp.ne.s32.totalorder %s123, %s124
    %p133 = scmp.eq.s32.totalorder %s18, 0
    %p134 = por %p132, %p133
    %p135 = scmp.ne.s32.totalorder %s123, %s124
    %p136 = scmp.eq.s32.totalorder %s19, 1
    %p137 = por %p135, %p136
    %p139 = scmp.ne.s32.totalorder %s124, %s138
    %p140 = scmp.eq.s32.totalorder %s19, 0
    %p141 = por %p139, %p140
    %s143 = sadd.s32 %s142, 1
    %p146 = scmp.eq.s32.totalorder %s13, 1
    %p147 = scmp.ne.s32.totalorder %s142, %s144
    %p148 = scmp.eq.s32.totalorder %s13, 0
    %p149 = por %p147, %p148
    %p150 = scmp.ne.s32.totalorder %s142, %s144
    %p151 = scmp.eq.s32.totalorder %s18, 1
    %p152 = por %p150, %p151
    %p153 = scmp.ne.s32.totalorder %s144, %s145
    %p154 = scmp.eq.s32.totalorder %s18, 0
    %p155 = por %p153, %p154
    %p156 = scmp.ne.s32.totalorder %s144, %s145
    %p157 = scmp.eq.s32.totalorder %s19, 1
    %p158 = por %p156, %p157
    %p160 = scmp.ne.s32.totalorder %s145, %s159
    %p161 = scmp.eq.s32.totalorder %s19, 0
    %p162 = por %p160, %p161
    %s163 = sadd.s32 %s21, %s22
    %s164 = sadd.s32 %s35, %s31
    %s165 = ssub.s32 %s20, %s39
    %s166 = ssub.s32 %s163, %s164
    %s167 = sor.u32 %s165, %s166
    %p168 = scmp.eq.s32.totalorder %s167, 0
    %s170 = sadd.s32 %s169, 1
    %s171 = scalar_select %p168, %s169, %s170
    %p174 = pneg %p168
    %p175 = scmp.eq.s32.totalorder %s13, 1
    %p176 = por %p174, %p175
    %p177 = scmp.ne.s32.totalorder %s169, %s172
    %p178 = scmp.eq.s32.totalorder %s13, 0
    %p179 = por %p177, %p178
    %p180 = scmp.ne.s32.totalorder %s169, %s172
    %p181 = scmp.eq.s32.totalorder %s18, 1
    %p182 = por %p180, %p181
    %p183 = scmp.ne.s32.totalorder %s172, %s173
    %p184 = scmp.eq.s32.totalorder %s18, 0
    %p185 = por %p183, %p184
    %p186 = scmp.ne.s32.totalorder %s172, %s173
    %p187 = scmp.eq.s32.totalorder %s19, 1
    %p188 = por %p186, %p187
    %p190 = scmp.ne.s32.totalorder %s173, %s189
    %p191 = scmp.eq.s32.totalorder %s19, 0
    %p192 = por %p190, %p191
    %s193 = ssub.s32 %s20, %s39
    %s194 = ssub.s32 %s21, %s35
    %s195 = sor.u32 %s193, %s194
    %p196 = scmp.eq.s32.totalorder %s195, 0
    %s198 = sadd.s32 %s197, 1
    %s199 = scalar_select %p196, %s197, %s198
    %p202 = pneg %p196
    %p203 = scmp.eq.s32.totalorder %s13, 1
    %p204 = por %p202, %p203
    %p205 = scmp.ne.s32.totalorder %s197, %s200
    %p206 = scmp.eq.s32.totalorder %s13, 0
    %p207 = por %p205, %p206
    %p208 = scmp.ne.s32.totalorder %s197, %s200
    %p209 = scmp.eq.s32.totalorder %s18, 1
    %p210 = por %p208, %p209
    %p211 = scmp.ne.s32.totalorder %s200, %s201
    %p212 = scmp.eq.s32.totalorder %s18, 0
    %p213 = por %p211, %p212
    %p214 = scmp.ne.s32.totalorder %s200, %s201
    %p215 = scmp.eq.s32.totalorder %s19, 1
    %p216 = por %p214, %p215
    %p218 = scmp.ne.s32.totalorder %s201, %s217
    %p219 = scmp.eq.s32.totalorder %s19, 0
    %p220 = por %p218, %p219
    %p221 = scmp.le.s32.totalorder 1, %s13
    %p222 = scmp.lt.s32.totalorder %s13, 3
    %p223 = pnand %p221, %p222
    %p224 = pneg %p223
    // Predicated region
    $region9: #{tcn_block_forward.4} parent=5 // pred_check
      _
    $region10: #{tcn_block_forward.4} parent=5 // pred_check_branch
      %226 = sbr.rel (%p223) target = $region12
    $region11: #{tcn_block_forward.4} parent=5 // pred_region
      %s227 = ssub.s32 %s13, 1
      // Predicated region
      $region13: #{tcn_block_forward.4} parent=11 // pred_check
        %p228 = pneg %p113
      $region14: #{tcn_block_forward.4} parent=11 // pred_check_branch
        %230 = sbr.rel (%p228) target = $region16
      $region15: #{tcn_block_forward.4} parent=11 // pred_region
        _
      $region16: #{tcn_block_forward.4} parent=11 // pred_fallthru
        _
      // Predicated region
      $region17: #{tcn_block_forward.4} parent=11 // pred_check
        %p231 = pneg %p134
      $region18: #{tcn_block_forward.4} parent=11 // pred_check_branch
        %233 = sbr.rel (%p231) target = $region20
      $region19: #{tcn_block_forward.4} parent=11 // pred_region
        _
      $region20: #{tcn_block_forward.4} parent=11 // pred_fallthru
        _
      // Predicated region
      $region21: #{tcn_block_forward.4} parent=11 // pred_check
        %p234 = pneg %p155
      $region22: #{tcn_block_forward.4} parent=11 // pred_check_branch
        %236 = sbr.rel (%p234) target = $region24
      $region23: #{tcn_block_forward.4} parent=11 // pred_region
        _
      $region24: #{tcn_block_forward.4} parent=11 // pred_fallthru
        _
    $region12: #{tcn_block_forward.4} parent=5 // pred_fallthru
      _
    %p237 = scmp.lt.s32.totalorder %s13, 2
    // Predicated region
    $region25: #{tcn_block_forward.4} parent=5 // pred_check
      %p238 = pneg %p237
    $region26: #{tcn_block_forward.4} parent=5 // pred_check_branch
      %240 = sbr.rel (%p238) target = $region28
    $region27: #{tcn_block_forward.4} parent=5 // pred_region
      // Predicated region
      $region29: #{tcn_block_forward.4} parent=27 // pred_check
        %p241 = pneg %p56
      $region30: #{tcn_block_forward.4} parent=27 // pred_check_branch
        %243 = sbr.rel (%p241) target = $region32
      $region31: #{tcn_block_forward.4} parent=27 // pred_region
        %s244 = sadd.s32 %s21, %s22
        %p245 = scmp.lt.s32.totalorder %s20, 1
        %s246 = scalar_select %p245, %s20, 1
        %p247 = scmp.lt.s32.totalorder %s244, 0
        %s248 = scalar_select %p247, %s244, 0
        %s249 = sadd.s32 %s248, %s246
        %s250 = smul.addr %s249, 8
        %s251 = scalar_lea.vmem %s0, %s250
        %s252 = sadd.s32 %s21, %s22
      $region32: #{tcn_block_forward.4} parent=27 // pred_fallthru
        _
      // Predicated region
      $region33: #{tcn_block_forward.4} parent=27 // pred_check
        %p253 = pneg %p86
      $region34: #{tcn_block_forward.4} parent=27 // pred_check_branch
        %255 = sbr.rel (%p253) target = $region36
      $region35: #{tcn_block_forward.4} parent=27 // pred_region
        %s256 = sadd.s32 %s21, %s22
        %p257 = scmp.lt.s32.totalorder %s20, 1
        %s258 = scalar_select %p257, %s20, 1
        %p259 = scmp.lt.s32.totalorder %s256, 0
        %s260 = scalar_select %p259, %s256, 0
        %s261 = sadd.s32 %s260, %s258
        %s262 = smul.addr %s261, 8
        %s263 = scalar_lea.vmem %s1, %s262
        %s264 = sadd.s32 %s21, %s22
      $region36: #{tcn_block_forward.4} parent=27 // pred_fallthru
        _
    $region28: #{tcn_block_forward.4} parent=5 // pred_fallthru
      _
    %p265 = scmp.le.s32.totalorder 1, %s13
    %p266 = scmp.lt.s32.totalorder %s13, 3
    %p267 = pnand %p265, %p266
    %p268 = pneg %p267
    // Predicated region
    $region37: #{tcn_block_forward.4} parent=5 // pred_check
      _
    $region38: #{tcn_block_forward.4} parent=5 // pred_check_branch
      %270 = sbr.rel (%p267) target = $region40
    $region39: #{tcn_block_forward.4} parent=5 // pred_region
      %s271 = ssub.s32 %s13, 1
      %s272 = sadd.s32 %s24, %s25
      %p273 = scmp.lt.s32.totalorder %s23, 1
      %s274 = scalar_select %p273, %s23, 1
      %p275 = scmp.lt.s32.totalorder %s272, 0
      %s276 = scalar_select %p275, %s272, 0
      %s277 = sadd.s32 %s276, %s274
      %s278 = smul.addr %s277, 8
      %s279 = scalar_lea.vmem %s0, %s278
      %p280 = pneg %p62
      %p281 = pneg %p59
      %s282 = sadd.s32 %s24, %s25
      %p283 = scmp.lt.s32.totalorder %s23, 1
      %s284 = scalar_select %p283, %s23, 1
      %p285 = scmp.lt.s32.totalorder %s282, 0
      %s286 = scalar_select %p285, %s282, 0
      %s287 = sadd.s32 %s286, %s284
      %s288 = smul.addr %s287, 8
      %s289 = scalar_lea.vmem %s1, %s288
      %p290 = pneg %p92
      %p291 = pneg %p89
      %p292 = pneg %p113
      %p293 = pneg %p110
      %p294 = pneg %p134
      %p295 = pneg %p131
      %p296 = pneg %p155
      %p297 = pneg %p152
      %p298 = pneg %p185
      %p299 = pneg %p182
      %s300 = sadd.s32 %s24, %s25
      %p301 = scmp.lt.s32.totalorder %s23, 1
      %s302 = scalar_select %p301, %s23, 1
      %p303 = scmp.lt.s32.totalorder %s300, 0
      %s304 = scalar_select %p303, %s300, 0
      %s305 = sadd.s32 %s304, %s302
      %s306 = smul.addr %s305, 8
      %s307 = scalar_lea.vmem %s5, %s306
      %p308 = pneg %p213
      %p309 = pneg %p210
      %p310 = scmp.lt.s32.totalorder %s23, 1
      %s311 = scalar_select %p310, %s23, 1
      %p312 = scmp.lt.s32.totalorder %s24, 0
      %s313 = scalar_select %p312, %s24, 0
      %s314 = sadd.s32 %s313, %s311
      %s315 = smul.addr %s314, 8
      %s316 = scalar_lea.vmem %s6, %s315
      %s317 = sadd.s32 %s24, %s25
      %p318 = scmp.lt.s32.totalorder %s23, 1
      %s319 = scalar_select %p318, %s23, 1
      %p320 = scmp.lt.s32.totalorder %s317, 0
      %s321 = scalar_select %p320, %s317, 0
      %s322 = sadd.s32 %s321, %s319
      %s323 = smul.addr %s322, 8
      %s324 = scalar_lea.vmem %s0, %s323
      %s325 = sadd.s32 %s24, %s25
      %s326 = sadd.s32 %s24, %s25
      %p327 = scmp.lt.s32.totalorder %s23, 1
      %s328 = scalar_select %p327, %s23, 1
      %p329 = scmp.lt.s32.totalorder %s326, 0
      %s330 = scalar_select %p329, %s326, 0
      %s331 = sadd.s32 %s330, %s328
      %s332 = smul.addr %s331, 8
      %s333 = scalar_lea.vmem %s1, %s332
      %s334 = sadd.s32 %s24, %s25
      %s335 = sadd.s32 %s24, %s25
      %p336 = scmp.lt.s32.totalorder %s23, 1
      %s337 = scalar_select %p336, %s23, 1
      %p338 = scmp.lt.s32.totalorder %s335, 0
      %s339 = scalar_select %p338, %s335, 0
      %s340 = sadd.s32 %s339, %s337
      %s341 = smul.addr %s340, 8
      %s342 = scalar_lea.vmem %s5, %s341
      %s343 = sadd.s32 %s24, %s25
      %p344 = scmp.lt.s32.totalorder %s23, 1
      %s345 = scalar_select %p344, %s23, 1
      %p346 = scmp.lt.s32.totalorder %s24, 0
      %s347 = scalar_select %p346, %s24, 0
      %s348 = sadd.s32 %s347, %s345
      %s349 = smul.addr %s348, 8
      %s350 = scalar_lea.vmem %s6, %s349
      %v351 = vld [vmem:[%s324] sm:$0xff]
      %v352 = vld [vmem:[%s333] sm:$0xff]
      %354 = vrot.lane.b32.xlu0 %v352, 12
      %v355 = vpop.permute.xlu0 %354
      %vm357 = vcmask 97280
      %v358 = vsel %vm357, %v351, %v355
      %v359 = vld [vmem:[%s2] sm:$0xff]
      %361 = vset.pattern.permute.xlu0 0
      %362 = vperm.xlu0 %361, %v359
      %v363 = vpop.permute.xlu0 %362
      %v365 = vmul.f32 %v358, %v363
      %v366 = vld [vmem:[%s3] sm:$0xff]
      %368 = vset.pattern.permute.xlu0 0
      %369 = vperm.xlu0 %368, %v366
      %v370 = vpop.permute.xlu0 %369
      %v372 = vadd.f32 %v365, %v370
      %vm373 = vcmp.ge.f32.partialorder %v372, 0.0
      %v374 = vmul.f32 %v372, 0.01
      %v375 = vsel %vm373, %v372, %v374
      %s376 = sadd.s32 %s24, %s25
      %378 = vrot.lane.b32.xlu0 %v375, 127
      %v379 = vpop.permute.xlu0 %378
      %381 = vrot.lane.b32.xlu0 %v375, 126
      %v382 = vpop.permute.xlu0 %381
      %384 = vrot.lane.b32.xlu0 %v375, 125
      %v385 = vpop.permute.xlu0 %384
      %387 = vrot.lane.b32.xlu0 %v375, 124
      %v388 = vpop.permute.xlu0 %387
      %v390 = vld [vmem:[%s4] sm:$0xff]
      %vm391 = vcmask 326656
      %v393 = vsel %vm391, %v390, 0
      %395 = vmatprep.subr.mxu0 0.0
      %396 = vmatpush1.msra.mxu0 %v375
      %397 = vmatprep.subr.mxu0 0.0
      %398 = vmatpush1.msra.mxu0 %v379
      %399 = vmatprep.subr.mxu0 0.0
      %400 = vmatpush1.msra.mxu0 %v382
      %401 = vmatprep.subr.mxu0 0.0
      %402 = vmatpush1.msra.mxu0 %v385
      %403 = vmatprep.subr.mxu0 0.0
      %404 = vmatpush1.msra.mxu0 %v388
      %405 = vmatprep.subr.mxu0 0.0
      %406 = vmatpush1.msra.mxu0 0.0
      %407 = vmatprep.subr.mxu0 0.0
      %408 = vmatpush1.msra.mxu0 0.0
      %409 = vmatprep.subr.mxu0 0.0
      %410 = vmatpush1.msra.mxu0 0.0
      %411 = vmatprep.subr.mxu0 0.0
      %412 = vmatpush1.msra.mxu0 0.0
      %413 = vmatprep.subr.mxu0 0.0
      %414 = vmatpush1.msra.mxu0 0.0
      %415 = vmatprep.subr.mxu0 0.0
      %416 = vmatpush1.msra.mxu0 0.0
      %417 = vmatprep.subr.mxu0 0.0
      %418 = vmatpush1.msra.mxu0 0.0
      %419 = vmatprep.subr.mxu0 0.0
      %420 = vmatpush1.msra.mxu0 0.0
      %421 = vmatprep.subr.mxu0 0.0
      %422 = vmatpush1.msra.mxu0 0.0
      %423 = vmatprep.subr.mxu0 0.0
      %424 = vmatpush1.msra.mxu0 0.0
      %425 = vmatprep.subr.mxu0 0.0
      %426 = vmatpush1.msra.mxu0 0.0
      %427 = vmatprep.subr.mxu0 0.0
      %428 = vmatpush1.msra.mxu0 0.0
      %429 = vmatprep.subr.mxu0 0.0
      %430 = vmatpush1.msra.mxu0 0.0
      %431 = vmatprep.subr.mxu0 0.0
      %432 = vmatpush1.msra.mxu0 0.0
      %433 = vmatprep.subr.mxu0 0.0
      %434 = vmatpush1.msra.mxu0 0.0
      %435 = vmatprep.subr.mxu0 0.0
      %436 = vmatpush1.msra.mxu0 0.0
      %437 = vmatprep.subr.mxu0 0.0
      %438 = vmatpush1.msra.mxu0 0.0
      %439 = vmatprep.subr.mxu0 0.0
      %440 = vmatpush1.msra.mxu0 0.0
      %441 = vmatprep.subr.mxu0 0.0
      %442 = vmatpush1.msra.mxu0 0.0
      %443 = vmatprep.subr.mxu0 0.0
      %444 = vmatpush1.msra.mxu0 0.0
      %445 = vmatprep.subr.mxu0 0.0
      %446 = vmatpush1.msra.mxu0 0.0
      %447 = vmatprep.subr.mxu0 0.0
      %448 = vmatpush1.msra.mxu0 0.0
      %449 = vmatprep.subr.mxu0 0.0
      %450 = vmatpush1.msra.mxu0 0.0
      %451 = vmatprep.subr.mxu0 0.0
      %452 = vmatpush1.msra.mxu0 0.0
      %453 = vmatprep.subr.mxu0 0.0
      %454 = vmatpush1.msra.mxu0 0.0
      %455 = vmatprep.subr.mxu0 0.0
      %456 = vmatpush1.msra.mxu0 0.0
      %457 = vmatprep.subr.mxu0 0.0
      %458 = vmatpush1.msra.mxu0 0.0
      %459 = vmatprep.mubr.f32.mxu0 0.0
      %460 = vmatmul.mubr.f32.gmra.mrb[0].mxu0 %v393
      %v461 = vpop.f32.mrb[0].mxu0
      %v462 = vadd.f32 0.0, %v461
      %v463 = vpop.f32.mrb[0].mxu0
      %464 = vdwg.mxu0
      %465 = vst.msk [vmem:[%s342] sm:$0xff] %vm357, %v462
      %p466 = scmp.eq.s32.totalorder %s25, 0
      // Predicated region
      $region41: #{tcn_block_forward.4} parent=39 // pred_check
        %p467 = pneg %p466
      $region42: #{tcn_block_forward.4} parent=39 // pred_check_branch
        %469 = sbr.rel (%p467) target = $region44
      $region43: #{tcn_block_forward.4} parent=39 // pred_region
        %vm470 = vcmask 15360
        %471 = vst.msk [vmem:[%s350] sm:$0xff] %vm470, 0.0
      $region44: #{tcn_block_forward.4} parent=39 // pred_fallthru
        _
      %s472 = sadd.s32 %s376, 1
      %s473 = smul.u32 %s472, 12
      %p474 = scmp.le.s32.totalorder %s473, 8
      // Predicated region
      $region45: #{tcn_block_forward.4} parent=39 // pred_check
        %p475 = pneg %p474
      $region46: #{tcn_block_forward.4} parent=39 // pred_check_branch
        %477 = sbr.rel (%p475) target = $region48
      $region47: #{tcn_block_forward.4} parent=39 // pred_region
        %v478 = vsel %vm357, %v462, 0.0
        %479 = vadd.xlane.f32.xlu0 %v478
        %v480 = vpop.xlane.xlu0 %479
        %v481 = vmul.f32 %v462, %v462
        %v482 = vsel %vm357, %v481, 0.0
        %483 = vadd.xlane.f32.xlu0 %v482
        %v484 = vpop.xlane.xlu0 %483
        %vm485 = vcmask 7168
        %v486 = vsel %vm485, %v480, %v484
        %v487 = vld [vmem:[%s350] sm:$0xff]
        %v488 = vadd.f32 %v487, %v486
        %vm489 = vcmask 15360
        %490 = vst.msk [vmem:[%s350] sm:$0xff] %vm489, %v488
      $region48: #{tcn_block_forward.4} parent=39 // pred_fallthru
        _
      %p491 = scmp.gt.s32.totalorder %s473, 8
      // Predicated region
      $region49: #{tcn_block_forward.4} parent=39 // pred_check
        %p492 = pneg %p491
      $region50: #{tcn_block_forward.4} parent=39 // pred_check_branch
        %494 = sbr.rel (%p492) target = $region52
      $region51: #{tcn_block_forward.4} parent=39 // pred_region
        %v495 = vlaneseq
        %v496 = vand.u32 %v495, 127
        %s497 = smul.u32 %s376, 12
        %v498 = vstv %s497
        %v499 = vadd.s32 %v498, %v496
        %vm500 = vcmp.lt.s32.totalorder %v499, 8
        %v501 = vsel %vm500, %v462, 0.0
        %v502 = vsel %vm357, %v501, 0.0
        %503 = vadd.xlane.f32.xlu0 %v502
        %v504 = vpop.xlane.xlu0 %503
        %v505 = vmul.f32 %v501, %v501
        %v506 = vsel %vm357, %v505, 0.0
        %507 = vadd.xlane.f32.xlu0 %v506
        %v508 = vpop.xlane.xlu0 %507
        %vm509 = vcmask 7168
        %v510 = vsel %vm509, %v504, %v508
        %v511 = vld [vmem:[%s350] sm:$0xff]
        %v512 = vadd.f32 %v511, %v510
        %vm513 = vcmask 15360
        %514 = vst.msk [vmem:[%s350] sm:$0xff] %vm513, %v512
      $region52: #{tcn_block_forward.4} parent=39 // pred_fallthru
        _
      %s515 = sadd.s32 %s24, %s25
      %p516 = scmp.lt.s32.totalorder %s23, 1
      %s517 = scalar_select %p516, %s23, 1
      %p518 = scmp.lt.s32.totalorder %s515, 0
      %s519 = scalar_select %p518, %s515, 0
      %s520 = sadd.s32 %s519, %s517
      %s521 = smul.addr %s520, 8
      %s522 = scalar_lea.vmem %s5, %s521
      %p523 = scmp.lt.s32.totalorder %s23, 1
      %s524 = scalar_select %p523, %s23, 1
      %p525 = scmp.lt.s32.totalorder %s24, 0
      %s526 = scalar_select %p525, %s24, 0
      %s527 = sadd.s32 %s526, %s524
      %s528 = smul.addr %s527, 8
      %s529 = scalar_lea.vmem %s6, %s528
      // Predicated region
      $region53: #{tcn_block_forward.4} parent=39 // pred_check
        %p530 = pneg %p182
      $region54: #{tcn_block_forward.4} parent=39 // pred_check_branch
        %532 = sbr.rel (%p530) target = $region56
      $region55: #{tcn_block_forward.4} parent=39 // pred_region
        %s533 = sadd.s32 %s24, %s25
      $region56: #{tcn_block_forward.4} parent=39 // pred_fallthru
        _
      // Predicated region
      $region57: #{tcn_block_forward.4} parent=39 // pred_check
        %p534 = pneg %p210
      $region58: #{tcn_block_forward.4} parent=39 // pred_check_branch
        %536 = sbr.rel (%p534) target = $region60
      $region59: #{tcn_block_forward.4} parent=39 // pred_region
        _
      $region60: #{tcn_block_forward.4} parent=39 // pred_fallthru
        _
    $region40: #{tcn_block_forward.4} parent=5 // pred_fallthru
      _
    %p537 = scmp.le.s32.totalorder 2, %s13
    // Predicated region
    $region61: #{tcn_block_forward.4} parent=5 // pred_check
      %p538 = pneg %p537
    $region62: #{tcn_block_forward.4} parent=5 // pred_check_branch
      %540 = sbr.rel (%p538) target = $region64
    $region63: #{tcn_block_forward.4} parent=5 // pred_region
      %s541 = ssub.s32 %s13, 2
      // Predicated region
      $region65: #{tcn_block_forward.4} parent=63 // pred_check
        %p542 = pneg %p188
      $region66: #{tcn_block_forward.4} parent=63 // pred_check_branch
        %544 = sbr.rel (%p542) target = $region68
      $region67: #{tcn_block_forward.4} parent=63 // pred_region
        %s545 = sadd.s32 %s27, %s28
        %p546 = scmp.lt.s32.totalorder %s26, 1
        %s547 = scalar_select %p546, %s26, 1
        %p548 = scmp.lt.s32.totalorder %s545, 0
        %s549 = scalar_select %p548, %s545, 0
        %s550 = sadd.s32 %s549, %s547
        %s551 = smul.addr %s550, 8
        %s552 = scalar_lea.vmem %s5, %s551
      $region68: #{tcn_block_forward.4} parent=63 // pred_fallthru
        _
      // Predicated region
      $region69: #{tcn_block_forward.4} parent=63 // pred_check
        %p553 = pneg %p216
      $region70: #{tcn_block_forward.4} parent=63 // pred_check_branch
        %555 = sbr.rel (%p553) target = $region72
      $region71: #{tcn_block_forward.4} parent=63 // pred_region
        %p556 = scmp.lt.s32.totalorder %s26, 1
        %s557 = scalar_select %p556, %s26, 1
        %p558 = scmp.lt.s32.totalorder %s27, 0
        %s559 = scalar_select %p558, %s27, 0
        %s560 = sadd.s32 %s559, %s557
        %s561 = smul.addr %s560, 8
        %s562 = scalar_lea.vmem %s6, %s561
      $region72: #{tcn_block_forward.4} parent=63 // pred_fallthru
        _
    $region64: #{tcn_block_forward.4} parent=5 // pred_fallthru
      _
  $region6: #{tcn_block_forward.4} parent=0 // loop_footer
    %s17 = sadd.s32 1, %s13
  $region7: #{tcn_block_forward.4} parent=0 // loop_footer_branch
    %12 = sbr.rel target = $region3
  $region8: #{tcn_block_forward.4} parent=0 // loop_exit
    _

</llo_original>
